<compile_context>
chip_gen: v7x
topology: tpu7x:2x2x1
jax: 0.10.0
libtpu: 0.0.40
codegen_flags: <defaults>
</compile_context>

<pallas_src>
import functools

import jax
import jax.numpy as jnp
from jax import lax
from jax.experimental import pallas as pl
from jax.experimental.pallas import tpu as pltpu

LANE = 128
SUBLANE = 8


def _round_up(x, m):
    return (x + m - 1) // m * m


def _fwd_kernel(s_ref, a_ref, w1s_ref, w1a_ref, b1_ref, w2_ref, b2_ref, o_ref,
                *, compute_dtype, precision):
    # s_ref  : (TB, S)  f32      a_ref  : (TB, A)  f32   (raw activations)
    # w1s_ref: (S, Hp)           w1a_ref: (A, Hp)        (compute dtype)
    # b1_ref : (1, Hp) f32       w2_ref : (Hp, Op)       b2_ref: (1, Op) f32
    # o_ref  : (TB, Op)          (lane-dense, Op multiple of 128)
    s = s_ref[...].astype(compute_dtype)          # in-kernel cast (cheap VPU op)
    a = a_ref[...].astype(compute_dtype)
    h = jnp.dot(s, w1s_ref[...], preferred_element_type=jnp.float32,
                precision=precision)
    h = h + jnp.dot(a, w1a_ref[...], preferred_element_type=jnp.float32,
                    precision=precision)
    # Bias + ReLU epilogue in f32 vregs (no bf16 VPU ops -> v5e-safe).
    h = jnp.maximum(h + b1_ref[...], 0.0)
    out = jnp.dot(h.astype(w2_ref.dtype), w2_ref[...],
                  preferred_element_type=jnp.float32, precision=precision)
    o_ref[...] = (out + b2_ref[...]).astype(o_ref.dtype)


def prepare_params(params, state_size, compute_dtype=jnp.bfloat16):
    """One-time param prep: split W1 (fuses the concat), zero-pad hidden and
    output dims to 128 lanes, cast matmul weights to the compute dtype
    (biases stay f32 for the f32 epilogue)."""
    w1, b1, w2, b2 = params
    in_dim, hidden = w1.shape
    out_dim = w2.shape[1]
    h_pad = _round_up(hidden, LANE)
    o_pad = _round_up(out_dim, LANE)

    def pad_to(x, shape):
        return jnp.pad(x, [(0, t - s) for s, t in zip(x.shape, shape)])

    w1_s = pad_to(w1[:state_size], (state_size, h_pad)).astype(compute_dtype)
    w1_a = pad_to(w1[state_size:], (in_dim - state_size, h_pad)).astype(compute_dtype)
    b1_p = pad_to(b1.reshape(1, hidden), (1, h_pad)).astype(jnp.float32)
    w2_p = pad_to(w2, (h_pad, o_pad)).astype(compute_dtype)
    b2_p = pad_to(b2.reshape(1, out_dim), (1, o_pad)).astype(jnp.float32)
    return dict(w1_s=w1_s, w1_a=w1_a, b1=b1_p, w2=w2_p, b2=b2_p,
                out_dim=out_dim, compute_dtype=compute_dtype)


def model_forward(state, action, prepared, tile_b=1024, out_dtype=None):
    """Pallas forward-dynamics MLP.

    state:  (B, state_size) f32,  action: (B, action_size) f32
    returns (B, state_size) in `out_dtype` (defaults to the compute dtype;
    bf16 output halves the dominant HBM write stream).
    """
    w1_s, w1_a = prepared["w1_s"], prepared["w1_a"]
    b1, w2, b2 = prepared["b1"], prepared["w2"], prepared["b2"]
    out_dim = prepared["out_dim"]
    cdt = prepared["compute_dtype"]
    if out_dtype is None:
        out_dtype = cdt

    B, S = state.shape
    A = action.shape[1]
    H, OP = w2.shape

    # Batch tiling. Large tiles keep per-grid-step bytes well above the fixed
    # ~0.35us step overhead (review: 512-1024 on v5e/v6e, bigger on v7x).
    # Sublane packing of the *output* dtype sets the legal tile granule; if the
    # whole batch fits in one tile, block == full array dim which is always legal.
    pack = 16 if jnp.dtype(out_dtype) == jnp.dtype(jnp.bfloat16) else SUBLANE
    if B <= tile_b:
        tile_b = B
    else:
        tile_b = max(pack, (tile_b // pack) * pack)
    n_tiles = pl.cdiv(B, tile_b)          # Pallas masks the boundary block

    precision = lax.Precision.HIGHEST if cdt == jnp.float32 else None

    nbytes = lambda a: a.size * a.dtype.itemsize
    cost = pl.CostEstimate(
        flops=2 * B * (S * H + A * H + H * OP),
        transcendentals=0,
        bytes_accessed=(nbytes(state) + nbytes(action) + nbytes(w1_s)
                        + nbytes(w1_a) + nbytes(b1) + nbytes(w2) + nbytes(b2)
                        + B * OP * jnp.dtype(out_dtype).itemsize),
    )

    batch_spec = lambda d: pl.BlockSpec((tile_b, d), lambda i: (i, 0))
    const_spec = lambda shp: pl.BlockSpec(shp, lambda i: (0, 0))

    kernel = functools.partial(_fwd_kernel, compute_dtype=cdt, precision=precision)

    out = pl.pallas_call(
        kernel,
        out_shape=jax.ShapeDtypeStruct((B, OP), out_dtype),
        grid=(n_tiles,),
        in_specs=[
            batch_spec(S),            # state tile (raw f32, cast in-kernel)
            batch_spec(A),            # action tile
            const_spec(w1_s.shape),   # weights: resident across batch tiles
            const_spec(w1_a.shape),
            const_spec(b1.shape),
            const_spec(w2.shape),
            const_spec(b2.shape),
        ],
        out_specs=pl.BlockSpec((tile_b, OP), lambda i: (i, 0)),  # lane-dense
        compiler_params=pltpu.CompilerParams(
            dimension_semantics=("parallel",)),   # v7x dual-TC sharding
        cost_estimate=cost,
    )(state, action, w1_s, w1_a, b1, w2, b2)

    # Feature slice only (consumers wanting the padded slab can skip this).
    return out[:, :out_dim]


def init_params(key, state_size, action_size, hidden):
    k1, k2, k3, k4 = jax.random.split(key, 4)
    in_dim = state_size + action_size
    w1 = jax.random.normal(k1, (in_dim, hidden), jnp.float32) / jnp.sqrt(in_dim)
    b1 = jax.random.normal(k2, (1, hidden), jnp.float32) * 0.01
    w2 = jax.random.normal(k3, (hidden, state_size), jnp.float32) / jnp.sqrt(hidden)
    b2 = jax.random.normal(k4, (1, state_size), jnp.float32) * 0.01
    return w1, b1, w2, b2


if __name__ == "__main__":
    key = jax.random.PRNGKey(0)
    k_state, k_action, k_params = jax.random.split(key, 3)

    batch = 8
    state_size = 32
    action_size = 8
    hidden = 64   # padded to 128 lanes inside prepare_params

    state = jax.random.normal(k_state, (batch, state_size), jnp.float32)
    action = jax.random.normal(k_action, (batch, action_size), jnp.float32)
    params = init_params(k_params, state_size, action_size, hidden)

    # Plain-JAX reference (same math as the torch MLP subclass).
    w1, b1, w2, b2 = params
    x = jnp.concatenate([state, action], axis=-1)
    ref = jnp.maximum(x @ w1 + b1, 0.0) @ w2 + b2

    # f32 compute path (Precision.HIGHEST -> matches f32 reference on hardware).
    prep_f32 = prepare_params(params, state_size, compute_dtype=jnp.float32)
    out_f32 = jax.block_until_ready(model_forward(state, action, prep_f32))
    assert out_f32.shape == (batch, state_size)
    assert out_f32.dtype == jnp.float32
    assert jnp.allclose(out_f32, ref, atol=1e-4, rtol=1e-4)

    # Default path: bf16 matmul operands + bf16 lane-dense output,
    # f32 MXU accumulation + f32 epilogue.
    prep_bf16 = prepare_params(params, state_size)           # bf16 default
    out_bf16 = jax.block_until_ready(model_forward(state, action, prep_bf16))
    assert out_bf16.shape == (batch, state_size)
    assert out_bf16.dtype == jnp.bfloat16
    assert jnp.allclose(out_bf16.astype(jnp.float32), ref, atol=5e-2, rtol=5e-2)

    print("KERNEL_OK")
</pallas_src>

<mosaic_0001>
module attributes {stable_mosaic.version = 11 : i64} {
  func.func @_fwd_kernel(%arg0: i32, %arg1: memref<8x32xf32, #tpu.memory_space<vmem>>, %arg2: memref<8x8xf32, #tpu.memory_space<vmem>>, %arg3: memref<32x128xf32, #tpu.memory_space<vmem>>, %arg4: memref<8x128xf32, #tpu.memory_space<vmem>>, %arg5: memref<1x128xf32, #tpu.memory_space<vmem>>, %arg6: memref<128x128xf32, #tpu.memory_space<vmem>>, %arg7: memref<1x128xf32, #tpu.memory_space<vmem>>, %arg8: memref<8x128xf32, #tpu.memory_space<vmem>>) attributes {dimension_semantics = [#tpu.dimension_semantics<parallel>], iteration_bounds = array<i64: 1>, scalar_prefetch = 0 : i64, scratch_operands = 0 : i64, tpu.core_type = #tpu.core_type<tc>, window_params = [{transform_indices = @transform_0, window_bounds = array<i64: 8, 32>}, {transform_indices = @transform_1, window_bounds = array<i64: 8, 8>}, {pipeline_mode = #tpu.pipeline_mode<synchronous>, transform_indices = @transform_2, window_bounds = array<i64: 32, 128>}, {pipeline_mode = #tpu.pipeline_mode<synchronous>, transform_indices = @transform_3, window_bounds = array<i64: 8, 128>}, {pipeline_mode = #tpu.pipeline_mode<synchronous>, transform_indices = @transform_4, window_bounds = array<i64: 1, 128>}, {pipeline_mode = #tpu.pipeline_mode<synchronous>, transform_indices = @transform_5, window_bounds = array<i64: 128, 128>}, {pipeline_mode = #tpu.pipeline_mode<synchronous>, transform_indices = @transform_6, window_bounds = array<i64: 1, 128>}, {transform_indices = @transform_7, window_bounds = array<i64: 8, 128>}]} {
    %c0 = arith.constant 0 : index
    %c0_0 = arith.constant 0 : index
    %0 = vector.load %arg1[%c0, %c0_0] : memref<8x32xf32, #tpu.memory_space<vmem>>, vector<8x32xf32>
    %c0_1 = arith.constant 0 : index
    %c0_2 = arith.constant 0 : index
    %1 = vector.load %arg2[%c0_1, %c0_2] : memref<8x8xf32, #tpu.memory_space<vmem>>, vector<8x8xf32>
    %c0_3 = arith.constant 0 : index
    %c0_4 = arith.constant 0 : index
    %2 = vector.load %arg3[%c0_3, %c0_4] : memref<32x128xf32, #tpu.memory_space<vmem>>, vector<32x128xf32>
    %cst = arith.constant dense<0.000000e+00> : vector<8x128xf32>
    %3 = tpu.matmul %0, %2, %cst {dimension_numbers = #tpu.dot_dimension_numbers<[1], [0], [0], [1], [0, 0, 1, 1], [], []>, precision = #tpu.contract_precision<fp32>} : vector<8x32xf32>, vector<32x128xf32>, vector<8x128xf32> -> vector<8x128xf32>
    %c0_5 = arith.constant 0 : index
    %c0_6 = arith.constant 0 : index
    %4 = vector.load %arg4[%c0_5, %c0_6] : memref<8x128xf32, #tpu.memory_space<vmem>>, vector<8x128xf32>
    %cst_7 = arith.constant dense<0.000000e+00> : vector<8x128xf32>
    %5 = tpu.matmul %1, %4, %cst_7 {dimension_numbers = #tpu.dot_dimension_numbers<[1], [0], [0], [1], [0, 0, 1, 1], [], []>, precision = #tpu.contract_precision<fp32>} : vector<8x8xf32>, vector<8x128xf32>, vector<8x128xf32> -> vector<8x128xf32>
    %6 = arith.addf %3, %5 : vector<8x128xf32>
    %c0_8 = arith.constant 0 : index
    %c0_9 = arith.constant 0 : index
    %7 = vector.load %arg5[%c0_8, %c0_9] : memref<1x128xf32, #tpu.memory_space<vmem>>, vector<1x128xf32>
    %8 = vector.broadcast %7 : vector<1x128xf32> to vector<8x128xf32>
    %9 = arith.addf %6, %8 : vector<8x128xf32>
    %cst_10 = arith.constant 0.000000e+00 : f32
    %10 = vector.broadcast %cst_10 : f32 to vector<8x128xf32>
    %11 = arith.maximumf %9, %10 : vector<8x128xf32>
    %c0_11 = arith.constant 0 : index
    %c0_12 = arith.constant 0 : index
    %12 = vector.load %arg6[%c0_11, %c0_12] : memref<128x128xf32, #tpu.memory_space<vmem>>, vector<128x128xf32>
    %cst_13 = arith.constant dense<0.000000e+00> : vector<8x128xf32>
    %13 = tpu.matmul %11, %12, %cst_13 {dimension_numbers = #tpu.dot_dimension_numbers<[1], [0], [0], [1], [0, 0, 1, 1], [], []>, precision = #tpu.contract_precision<fp32>} : vector<8x128xf32>, vector<128x128xf32>, vector<8x128xf32> -> vector<8x128xf32>
    %c0_14 = arith.constant 0 : index
    %c0_15 = arith.constant 0 : index
    %14 = vector.load %arg7[%c0_14, %c0_15] : memref<1x128xf32, #tpu.memory_space<vmem>>, vector<1x128xf32>
    %15 = vector.broadcast %14 : vector<1x128xf32> to vector<8x128xf32>
    %16 = arith.addf %13, %15 : vector<8x128xf32>
    %c0_16 = arith.constant 0 : index
    %c0_17 = arith.constant 0 : index
    %17 = vector.load %arg8[%c0_16, %c0_17] : memref<8x128xf32, #tpu.memory_space<vmem>>, vector<8x128xf32>
    tpu.vector_store %arg8[%c0_16, %c0_17], %16 {strides = array<i32>} : memref<8x128xf32, #tpu.memory_space<vmem>>, vector<8x128xf32>,
    return
  }
  func.func @transform_0(%arg0: i32) -> (i32, i32) {
    %c0_i32 = arith.constant 0 : i32
    %c0_i32_0 = arith.constant 0 : i32
    return %arg0, %c0_i32 : i32, i32
  }
  func.func @transform_1(%arg0: i32) -> (i32, i32) {
    %c0_i32 = arith.constant 0 : i32
    %c0_i32_0 = arith.constant 0 : i32
    return %arg0, %c0_i32 : i32, i32
  }
  func.func @transform_2(%arg0: i32) -> (i32, i32) {
    %c0_i32 = arith.constant 0 : i32
    %c0_i32_0 = arith.constant 0 : i32
    %c0_i32_1 = arith.constant 0 : i32
    return %c0_i32, %c0_i32_0 : i32, i32
  }
  func.func @transform_3(%arg0: i32) -> (i32, i32) {
    %c0_i32 = arith.constant 0 : i32
    %c0_i32_0 = arith.constant 0 : i32
    %c0_i32_1 = arith.constant 0 : i32
    return %c0_i32, %c0_i32_0 : i32, i32
  }
  func.func @transform_4(%arg0: i32) -> (i32, i32) {
    %c0_i32 = arith.constant 0 : i32
    %c0_i32_0 = arith.constant 0 : i32
    %c0_i32_1 = arith.constant 0 : i32
    return %c0_i32, %c0_i32_0 : i32, i32
  }
  func.func @transform_5(%arg0: i32) -> (i32, i32) {
    %c0_i32 = arith.constant 0 : i32
    %c0_i32_0 = arith.constant 0 : i32
    %c0_i32_1 = arith.constant 0 : i32
    return %c0_i32, %c0_i32_0 : i32, i32
  }
  func.func @transform_6(%arg0: i32) -> (i32, i32) {
    %c0_i32 = arith.constant 0 : i32
    %c0_i32_0 = arith.constant 0 : i32
    %c0_i32_1 = arith.constant 0 : i32
    return %c0_i32, %c0_i32_0 : i32, i32
  }
  func.func @transform_7(%arg0: i32) -> (i32, i32) {
    %c0_i32 = arith.constant 0 : i32
    %c0_i32_0 = arith.constant 0 : i32
    return %arg0, %c0_i32 : i32, i32
  }
}

</mosaic_0001>

<llo_original>
// kernel: tpu_custom_call.1
$region0: #{tpu_custom_call.1}
  #allocation0 [shape = 'u32[]', space=smem, size = 0x4, offset = 0x4, fixed_abs, tag = 'smem constant byte address 0x4 - core index']
  #allocation1 [shape = 'u32[144,128]{1,0:T(1,128)}', space=vmem, size = 0x12000, scoped, tag = 'internal scratch']
  %s0 = inlined_call_operand.hbm [shape: f32[8,32], index: 0, kind: input, shape index: {}]
  %s1 = inlined_call_operand.hbm [shape: f32[8,8], index: 1, kind: input, shape index: {}]
  %s2 = inlined_call_operand.hbm [shape: f32[32,128], index: 2, kind: input, shape index: {}]
  %s3 = inlined_call_operand.vmem [shape: f32[8,128], index: 3, kind: input, shape index: {}]
  %s4 = inlined_call_operand.vmem [shape: f32[1,128], index: 4, kind: input, shape index: {}]
  %s5 = inlined_call_operand.hbm [shape: f32[128,128], index: 5, kind: input, shape index: {}]
  %s6 = inlined_call_operand.vmem [shape: f32[1,128], index: 6, kind: input, shape index: {}]
  %s7 = inlined_call_operand.hbm [shape: f32[8,128], index: 7, kind: output, shape index: {}]
  %s8 = sld [smem:[#allocation0]]
  $region54: #{tpu_custom_call.1} parent=0
    _
  %s10 = ssub.s32 1, %s8
  %s11 = scalar_select 0, %s10, %s8
  $region1: #{tpu_custom_call.1} parent=0
    #allocation2 [shape = 'u8[4096]{0}', space=vmem, size = 0x1000, scoped, tag = 'input window, operand 0, single buffered']
    #allocation3 [shape = 's32[1]{0}', space=sflag, size = 0x4, scoped, tag = 'scoped memory for tpu_custom_call.1']
    #allocation4 [shape = 's32[1]{0}', space=sflag, size = 0x4, scoped, tag = 'scoped memory for tpu_custom_call.1']
    #allocation5 [shape = 'u8[4096]{0}', space=vmem, size = 0x1000, scoped, tag = 'input window, operand 1, single buffered']
    #allocation6 [shape = 's32[1]{0}', space=sflag, size = 0x4, scoped, tag = 'scoped memory for tpu_custom_call.1']
    #allocation7 [shape = 'u8[16384]{0}', space=vmem, size = 0x4000, scoped, tag = 'input window, operand 2, single buffered']
    #allocation8 [shape = 'u8[65536]{0}', space=vmem, size = 0x10000, scoped, tag = 'input window, operand 5, single buffered']
    #allocation9 [shape = 's32[1]{0}', space=sflag, size = 0x4, scoped, tag = 'scoped memory for tpu_custom_call.1']
    #allocation10 [shape = 'u8[4096]{0}', space=vmem, size = 0x1000, scoped, tag = 'output window, operand 0, single buffered']
    %12 = vsyncpa [#allocation3], 0
    %13 = vsyncpa [#allocation6], 0
    %14 = vsyncpa [#allocation9], 0
    %15 = vsyncpa [#allocation4], 0
    // Predicated region
    $region2: #{tpu_custom_call.1} parent=1 // pred_check
      _
    $region3: #{tpu_custom_call.1} parent=1 // pred_check_branch
      %17 = sbr.rel (0) target = $region5
    $region4: #{tpu_custom_call.1} parent=1 // pred_region
      %s19 = ssub.s32 128, 128
      %20 = vsyncadd [#allocation3], %s19
      %s22 = sshll.u32 [#allocation2], 4
      %s23 = int_to_ptr.vmem [resolvable:$true] %s22
      %25 = dma.hbm_to_vmem [thread:$0]  %s0, 128, %s23, [#allocation3]
    $region5: #{tpu_custom_call.1} parent=1 // pred_fallthru
      _
    // Predicated region
    $region6: #{tpu_custom_call.1} parent=1 // pred_check
      _
    $region7: #{tpu_custom_call.1} parent=1 // pred_check_branch
      %27 = sbr.rel (0) target = $region9
    $region8: #{tpu_custom_call.1} parent=1 // pred_region
      %s29 = ssub.s32 128, 128
      %30 = vsyncadd [#allocation6], %s29
      %s32 = sshll.u32 [#allocation5], 4
      %s33 = int_to_ptr.vmem [resolvable:$true] %s32
      %35 = dma.hbm_to_vmem [thread:$0]  %s1, 128, %s33, [#allocation6]
    $region9: #{tpu_custom_call.1} parent=1 // pred_fallthru
      _
    // Predicated region
    $region10: #{tpu_custom_call.1} parent=1 // pred_check
      _
    $region11: #{tpu_custom_call.1} parent=1 // pred_check_branch
      %37 = sbr.rel (0) target = $region13
    $region12: #{tpu_custom_call.1} parent=1 // pred_region
      %s39 = ssub.s32 512, 512
      %40 = vsyncadd [#allocation6], %s39
      %s41 = sshll.u32 [#allocation7], 4
      %s42 = int_to_ptr.vmem [resolvable:$true] %s41
      %47 = dma.hbm_to_vmem [thread:$0]  %s2, 512, %s42, [#allocation6], 128, 128, 8
    $region13: #{tpu_custom_call.1} parent=1 // pred_fallthru
      _
    // Predicated region
    $region14: #{tpu_custom_call.1} parent=1 // pred_check
      _
    $region15: #{tpu_custom_call.1} parent=1 // pred_check_branch
      %49 = sbr.rel (0) target = $region17
    $region16: #{tpu_custom_call.1} parent=1 // pred_region
      _
    $region17: #{tpu_custom_call.1} parent=1 // pred_fallthru
      _
    // Predicated region
    $region18: #{tpu_custom_call.1} parent=1 // pred_check
      _
    $region19: #{tpu_custom_call.1} parent=1 // pred_check_branch
      %51 = sbr.rel (0) target = $region21
    $region20: #{tpu_custom_call.1} parent=1 // pred_region
      _
    $region21: #{tpu_custom_call.1} parent=1 // pred_fallthru
      _
    // Predicated region
    $region22: #{tpu_custom_call.1} parent=1 // pred_check
      _
    $region23: #{tpu_custom_call.1} parent=1 // pred_check_branch
      %53 = sbr.rel (0) target = $region25
    $region24: #{tpu_custom_call.1} parent=1 // pred_region
      %s55 = ssub.s32 2048, 2048
      %56 = vsyncadd [#allocation9], %s55
      %s57 = sshll.u32 [#allocation8], 4
      %s58 = int_to_ptr.vmem [resolvable:$true] %s57
      %63 = dma.hbm_to_vmem [thread:$0]  %s5, 2048, %s58, [#allocation9], 128, 128, 8
    $region25: #{tpu_custom_call.1} parent=1 // pred_fallthru
      _
    // Predicated region
    $region26: #{tpu_custom_call.1} parent=1 // pred_check
      _
    $region27: #{tpu_custom_call.1} parent=1 // pred_check_branch
      %65 = sbr.rel (0) target = $region29
    $region28: #{tpu_custom_call.1} parent=1 // pred_region
      _
    $region29: #{tpu_custom_call.1} parent=1 // pred_fallthru
      _
    // Predicated region
    $region30: #{tpu_custom_call.1} parent=1 // pred_check
      _
    $region31: #{tpu_custom_call.1} parent=1 // pred_check_branch
      %67 = sbr.rel (0) target = $region33
    $region32: #{tpu_custom_call.1} parent=1 // pred_region
      %68 = dma.done [#allocation3], 128
    $region33: #{tpu_custom_call.1} parent=1 // pred_fallthru
      _
    // Predicated region
    $region34: #{tpu_custom_call.1} parent=1 // pred_check
      _
    $region35: #{tpu_custom_call.1} parent=1 // pred_check_branch
      %70 = sbr.rel (0) target = $region37
    $region36: #{tpu_custom_call.1} parent=1 // pred_region
      %71 = dma.done [#allocation6], 128
    $region37: #{tpu_custom_call.1} parent=1 // pred_fallthru
      _
    // Predicated region
    $region38: #{tpu_custom_call.1} parent=1 // pred_check
      _
    $region39: #{tpu_custom_call.1} parent=1 // pred_check_branch
      %73 = sbr.rel (0) target = $region41
    $region40: #{tpu_custom_call.1} parent=1 // pred_region
      %74 = dma.done [#allocation6], 512
    $region41: #{tpu_custom_call.1} parent=1 // pred_fallthru
      _
    // Predicated region
    $region42: #{tpu_custom_call.1} parent=1 // pred_check
      _
    $region43: #{tpu_custom_call.1} parent=1 // pred_check_branch
      %76 = sbr.rel (0) target = $region45
    $region44: #{tpu_custom_call.1} parent=1 // pred_region
      %77 = dma.done [#allocation9], 2048
    $region45: #{tpu_custom_call.1} parent=1 // pred_fallthru
      _
    %v78 = vld [vmem:[#allocation2] sm:$0xff]
    %v79 = vld [vmem:[#allocation5] sm:$0xff]
    %v80 = vld [vmem:[#allocation7] sm:$0xff]
    %v81 = vld [vmem:[#allocation7 + $0x8] sm:$0xff]
    %v82 = vld [vmem:[#allocation7 + $0x10] sm:$0xff]
    %v83 = vld [vmem:[#allocation7 + $0x18] sm:$0xff]
    %v84 = vld [vmem:[%s3] sm:$0xff]
    %vm85 = vcmask 64512
    %v87 = vsel %vm85, %v79, 0
    %89 = vmatprep.subr.mxu0 0.0
    %v90 = vand.u32 %v84, 4294901760
    %91 = vmatpush1.msra.mxu0 %v90
    %92 = vmatprep.subr.mxu0 0.0
    %93 = vmatpush1.msra.mxu0 0.0
    %94 = vmatprep.subr.mxu0 0.0
    %95 = vmatpush1.msra.mxu0 0.0
    %96 = vmatprep.subr.mxu0 0.0
    %97 = vmatpush1.msra.mxu0 0.0
    %98 = vmatprep.subr.mxu0 0.0
    %99 = vmatpush1.msra.mxu0 0.0
    %100 = vmatprep.subr.mxu0 0.0
    %101 = vmatpush1.msra.mxu0 0.0
    %102 = vmatprep.subr.mxu0 0.0
    %103 = vmatpush1.msra.mxu0 0.0
    %104 = vmatprep.subr.mxu0 0.0
    %105 = vmatpush1.msra.mxu0 0.0
    %106 = vmatprep.subr.mxu0 0.0
    %107 = vmatpush1.msra.mxu0 0.0
    %108 = vmatprep.subr.mxu0 0.0
    %109 = vmatpush1.msra.mxu0 0.0
    %110 = vmatprep.subr.mxu0 0.0
    %111 = vmatpush1.msra.mxu0 0.0
    %112 = vmatprep.subr.mxu0 0.0
    %113 = vmatpush1.msra.mxu0 0.0
    %114 = vmatprep.subr.mxu0 0.0
    %115 = vmatpush1.msra.mxu0 0.0
    %116 = vmatprep.subr.mxu0 0.0
    %117 = vmatpush1.msra.mxu0 0.0
    %118 = vmatprep.subr.mxu0 0.0
    %119 = vmatpush1.msra.mxu0 0.0
    %120 = vmatprep.subr.mxu0 0.0
    %121 = vmatpush1.msra.mxu0 0.0
    %122 = vmatprep.subr.mxu0 0.0
    %123 = vmatpush1.msra.mxu0 0.0
    %124 = vmatprep.subr.mxu0 0.0
    %125 = vmatpush1.msra.mxu0 0.0
    %126 = vmatprep.subr.mxu0 0.0
    %127 = vmatpush1.msra.mxu0 0.0
    %128 = vmatprep.subr.mxu0 0.0
    %129 = vmatpush1.msra.mxu0 0.0
    %130 = vmatprep.subr.mxu0 0.0
    %131 = vmatpush1.msra.mxu0 0.0
    %132 = vmatprep.subr.mxu0 0.0
    %133 = vmatpush1.msra.mxu0 0.0
    %134 = vmatprep.subr.mxu0 0.0
    %135 = vmatpush1.msra.mxu0 0.0
    %136 = vmatprep.subr.mxu0 0.0
    %137 = vmatpush1.msra.mxu0 0.0
    %138 = vmatprep.subr.mxu0 0.0
    %139 = vmatpush1.msra.mxu0 0.0
    %140 = vmatprep.subr.mxu0 0.0
    %141 = vmatpush1.msra.mxu0 0.0
    %142 = vmatprep.subr.mxu0 0.0
    %143 = vmatpush1.msra.mxu0 0.0
    %144 = vmatprep.subr.mxu0 0.0
    %145 = vmatpush1.msra.mxu0 0.0
    %146 = vmatprep.subr.mxu0 0.0
    %147 = vmatpush1.msra.mxu0 0.0
    %148 = vmatprep.subr.mxu0 0.0
    %149 = vmatpush1.msra.mxu0 0.0
    %150 = vmatprep.subr.mxu0 0.0
    %151 = vmatpush1.msra.mxu0 0.0
    %152 = vmatprep.subr.mxu0 0.0
    %153 = vmatpush1.msra.mxu0 0.0
    %154 = vmatprep.mubr.f32.mxu0 0.0
    %v155 = vand.u32 %v87, 4294901760
    %v156 = vsub.f32 %v87, %v155
    %v157 = vand.u32 %v156, 4294901760
    %v158 = vsub.f32 %v156, %v157
    %v159 = vand.u32 %v158, 4294901760
    %160 = vmatmul.mubr.f32.gmra.mrb[0].mxu0 %v159
    %v161 = vpop.f32.mrb[0].mxu0
    %v162 = vadd.f32 0.0, %v161
    %v163 = vpop.f32.mrb[0].mxu0
    %164 = vdwg.mxu0
    %165 = vmatprep.subr.mxu0 0.0
    %v166 = vand.u32 %v84, 4294901760
    %v167 = vsub.f32 %v84, %v166
    %v168 = vand.u32 %v167, 4294901760
    %v169 = vsub.f32 %v167, %v168
    %v170 = vand.u32 %v169, 4294901760
    %171 = vmatpush1.msra.mxu0 %v170
    %172 = vmatprep.subr.mxu0 0.0
    %173 = vmatpush1.msra.mxu0 0.0
    %174 = vmatprep.subr.mxu0 0.0
    %175 = vmatpush1.msra.mxu0 0.0
    %176 = vmatprep.subr.mxu0 0.0
    %177 = vmatpush1.msra.mxu0 0.0
    %178 = vmatprep.subr.mxu0 0.0
    %179 = vmatpush1.msra.mxu0 0.0
    %180 = vmatprep.subr.mxu0 0.0
    %181 = vmatpush1.msra.mxu0 0.0
    %182 = vmatprep.subr.mxu0 0.0
    %183 = vmatpush1.msra.mxu0 0.0
    %184 = vmatprep.subr.mxu0 0.0
    %185 = vmatpush1.msra.mxu0 0.0
    %186 = vmatprep.subr.mxu0 0.0
    %187 = vmatpush1.msra.mxu0 0.0
    %188 = vmatprep.subr.mxu0 0.0
    %189 = vmatpush1.msra.mxu0 0.0
    %190 = vmatprep.subr.mxu0 0.0
    %191 = vmatpush1.msra.mxu0 0.0
    %192 = vmatprep.subr.mxu0 0.0
    %193 = vmatpush1.msra.mxu0 0.0
    %194 = vmatprep.subr.mxu0 0.0
    %195 = vmatpush1.msra.mxu0 0.0
    %196 = vmatprep.subr.mxu0 0.0
    %197 = vmatpush1.msra.mxu0 0.0
    %198 = vmatprep.subr.mxu0 0.0
    %199 = vmatpush1.msra.mxu0 0.0
    %200 = vmatprep.subr.mxu0 0.0
    %201 = vmatpush1.msra.mxu0 0.0
    %202 = vmatprep.subr.mxu0 0.0
    %203 = vmatpush1.msra.mxu0 0.0
    %204 = vmatprep.subr.mxu0 0.0
    %205 = vmatpush1.msra.mxu0 0.0
    %206 = vmatprep.subr.mxu0 0.0
    %207 = vmatpush1.msra.mxu0 0.0
    %208 = vmatprep.subr.mxu0 0.0
    %209 = vmatpush1.msra.mxu0 0.0
    %210 = vmatprep.subr.mxu0 0.0
    %211 = vmatpush1.msra.mxu0 0.0
    %212 = vmatprep.subr.mxu0 0.0
    %213 = vmatpush1.msra.mxu0 0.0
    %214 = vmatprep.subr.mxu0 0.0
    %215 = vmatpush1.msra.mxu0 0.0
    %216 = vmatprep.subr.mxu0 0.0
    %217 = vmatpush1.msra.mxu0 0.0
    %218 = vmatprep.subr.mxu0 0.0
    %219 = vmatpush1.msra.mxu0 0.0
    %220 = vmatprep.subr.mxu0 0.0
    %221 = vmatpush1.msra.mxu0 0.0
    %222 = vmatprep.subr.mxu0 0.0
    %223 = vmatpush1.msra.mxu0 0.0
    %224 = vmatprep.subr.mxu0 0.0
    %225 = vmatpush1.msra.mxu0 0.0
    %226 = vmatprep.subr.mxu0 0.0
    %227 = vmatpush1.msra.mxu0 0.0
    %228 = vmatprep.subr.mxu0 0.0
    %229 = vmatpush1.msra.mxu0 0.0
    %230 = vmatprep.subr.mxu0 0.0
    %231 = vmatpush1.msra.mxu0 0.0
    %232 = vmatprep.subr.mxu0 0.0
    %233 = vmatpush1.msra.mxu0 0.0
    %234 = vmatprep.mubr.f32.mxu0 0.0
    %v235 = vand.u32 %v87, 4294901760
    %236 = vmatmul.mubr.f32.gmra.mrb[0].mxu0 %v235
    %v237 = vpop.f32.mrb[0].mxu0
    %v238 = vadd.f32 %v162, %v237
    %v239 = vpop.f32.mrb[0].mxu0
    %240 = vdwg.mxu0
    %241 = vmatprep.subr.mxu0 0.0
    %v242 = vand.u32 %v84, 4294901760
    %v243 = vsub.f32 %v84, %v242
    %244 = vmatpush1.msra.mxu0 %v243
    %245 = vmatprep.subr.mxu0 0.0
    %246 = vmatpush1.msra.mxu0 0.0
    %247 = vmatprep.subr.mxu0 0.0
    %248 = vmatpush1.msra.mxu0 0.0
    %249 = vmatprep.subr.mxu0 0.0
    %250 = vmatpush1.msra.mxu0 0.0
    %251 = vmatprep.subr.mxu0 0.0
    %252 = vmatpush1.msra.mxu0 0.0
    %253 = vmatprep.subr.mxu0 0.0
    %254 = vmatpush1.msra.mxu0 0.0
    %255 = vmatprep.subr.mxu0 0.0
    %256 = vmatpush1.msra.mxu0 0.0
    %257 = vmatprep.subr.mxu0 0.0
    %258 = vmatpush1.msra.mxu0 0.0
    %259 = vmatprep.subr.mxu0 0.0
    %260 = vmatpush1.msra.mxu0 0.0
    %261 = vmatprep.subr.mxu0 0.0
    %262 = vmatpush1.msra.mxu0 0.0
    %263 = vmatprep.subr.mxu0 0.0
    %264 = vmatpush1.msra.mxu0 0.0
    %265 = vmatprep.subr.mxu0 0.0
    %266 = vmatpush1.msra.mxu0 0.0
    %267 = vmatprep.subr.mxu0 0.0
    %268 = vmatpush1.msra.mxu0 0.0
    %269 = vmatprep.subr.mxu0 0.0
    %270 = vmatpush1.msra.mxu0 0.0
    %271 = vmatprep.subr.mxu0 0.0
    %272 = vmatpush1.msra.mxu0 0.0
    %273 = vmatprep.subr.mxu0 0.0
    %274 = vmatpush1.msra.mxu0 0.0
    %275 = vmatprep.subr.mxu0 0.0
    %276 = vmatpush1.msra.mxu0 0.0
    %277 = vmatprep.subr.mxu0 0.0
    %278 = vmatpush1.msra.mxu0 0.0
    %279 = vmatprep.subr.mxu0 0.0
    %280 = vmatpush1.msra.mxu0 0.0
    %281 = vmatprep.subr.mxu0 0.0
    %282 = vmatpush1.msra.mxu0 0.0
    %283 = vmatprep.subr.mxu0 0.0
    %284 = vmatpush1.msra.mxu0 0.0
    %285 = vmatprep.subr.mxu0 0.0
    %286 = vmatpush1.msra.mxu0 0.0
    %287 = vmatprep.subr.mxu0 0.0
    %288 = vmatpush1.msra.mxu0 0.0
    %289 = vmatprep.subr.mxu0 0.0
    %290 = vmatpush1.msra.mxu0 0.0
    %291 = vmatprep.subr.mxu0 0.0
    %292 = vmatpush1.msra.mxu0 0.0
    %293 = vmatprep.subr.mxu0 0.0
    %294 = vmatpush1.msra.mxu0 0.0
    %295 = vmatprep.subr.mxu0 0.0
    %296 = vmatpush1.msra.mxu0 0.0
    %297 = vmatprep.subr.mxu0 0.0
    %298 = vmatpush1.msra.mxu0 0.0
    %299 = vmatprep.subr.mxu0 0.0
    %300 = vmatpush1.msra.mxu0 0.0
    %301 = vmatprep.subr.mxu0 0.0
    %302 = vmatpush1.msra.mxu0 0.0
    %303 = vmatprep.subr.mxu0 0.0
    %304 = vmatpush1.msra.mxu0 0.0
    %305 = vmatprep.subr.mxu0 0.0
    %306 = vmatpush1.msra.mxu0 0.0
    %307 = vmatprep.mubr.f32.mxu0 0.0
    %v308 = vand.u32 %v87, 4294901760
    %v309 = vsub.f32 %v87, %v308
    %310 = vmatmul.mubr.f32.gmra.mrb[0].mxu0 %v309
    %v311 = vpop.f32.mrb[0].mxu0
    %v312 = vadd.f32 %v238, %v311
    %v313 = vpop.f32.mrb[0].mxu0
    %314 = vdwg.mxu0
    %315 = vmatprep.subr.mxu0 0.0
    %v316 = vand.u32 %v84, 4294901760
    %317 = vmatpush1.msra.mxu0 %v316
    %318 = vmatprep.subr.mxu0 0.0
    %319 = vmatpush1.msra.mxu0 0.0
    %320 = vmatprep.subr.mxu0 0.0
    %321 = vmatpush1.msra.mxu0 0.0
    %322 = vmatprep.subr.mxu0 0.0
    %323 = vmatpush1.msra.mxu0 0.0
    %324 = vmatprep.subr.mxu0 0.0
    %325 = vmatpush1.msra.mxu0 0.0
    %326 = vmatprep.subr.mxu0 0.0
    %327 = vmatpush1.msra.mxu0 0.0
    %328 = vmatprep.subr.mxu0 0.0
    %329 = vmatpush1.msra.mxu0 0.0
    %330 = vmatprep.subr.mxu0 0.0
    %331 = vmatpush1.msra.mxu0 0.0
    %332 = vmatprep.subr.mxu0 0.0
    %333 = vmatpush1.msra.mxu0 0.0
    %334 = vmatprep.subr.mxu0 0.0
    %335 = vmatpush1.msra.mxu0 0.0
    %336 = vmatprep.subr.mxu0 0.0
    %337 = vmatpush1.msra.mxu0 0.0
    %338 = vmatprep.subr.mxu0 0.0
    %339 = vmatpush1.msra.mxu0 0.0
    %340 = vmatprep.subr.mxu0 0.0
    %341 = vmatpush1.msra.mxu0 0.0
    %342 = vmatprep.subr.mxu0 0.0
    %343 = vmatpush1.msra.mxu0 0.0
    %344 = vmatprep.subr.mxu0 0.0
    %345 = vmatpush1.msra.mxu0 0.0
    %346 = vmatprep.subr.mxu0 0.0
    %347 = vmatpush1.msra.mxu0 0.0
    %348 = vmatprep.subr.mxu0 0.0
    %349 = vmatpush1.msra.mxu0 0.0
    %350 = vmatprep.subr.mxu0 0.0
    %351 = vmatpush1.msra.mxu0 0.0
    %352 = vmatprep.subr.mxu0 0.0
    %353 = vmatpush1.msra.mxu0 0.0
    %354 = vmatprep.subr.mxu0 0.0
    %355 = vmatpush1.msra.mxu0 0.0
    %356 = vmatprep.subr.mxu0 0.0
    %357 = vmatpush1.msra.mxu0 0.0
    %358 = vmatprep.subr.mxu0 0.0
    %359 = vmatpush1.msra.mxu0 0.0
    %360 = vmatprep.subr.mxu0 0.0
    %361 = vmatpush1.msra.mxu0 0.0
    %362 = vmatprep.subr.mxu0 0.0
    %363 = vmatpush1.msra.mxu0 0.0
    %364 = vmatprep.subr.mxu0 0.0
    %365 = vmatpush1.msra.mxu0 0.0
    %366 = vmatprep.subr.mxu0 0.0
    %367 = vmatpush1.msra.mxu0 0.0
    %368 = vmatprep.subr.mxu0 0.0
    %369 = vmatpush1.msra.mxu0 0.0
    %370 = vmatprep.subr.mxu0 0.0
    %371 = vmatpush1.msra.mxu0 0.0
    %372 = vmatprep.subr.mxu0 0.0
    %373 = vmatpush1.msra.mxu0 0.0
    %374 = vmatprep.subr.mxu0 0.0
    %375 = vmatpush1.msra.mxu0 0.0
    %376 = vmatprep.subr.mxu0 0.0
    %377 = vmatpush1.msra.mxu0 0.0
    %378 = vmatprep.subr.mxu0 0.0
    %379 = vmatpush1.msra.mxu0 0.0
    %380 = vmatprep.mubr.f32.mxu0 0.0
    %v381 = vand.u32 %v87, 4294901760
    %v382 = vsub.f32 %v87, %v381
    %v383 = vand.u32 %v382, 4294901760
    %384 = vmatmul.mubr.f32.gmra.mrb[0].mxu0 %v383
    %v385 = vpop.f32.mrb[0].mxu0
    %v386 = vadd.f32 %v312, %v385
    %v387 = vpop.f32.mrb[0].mxu0
    %388 = vdwg.mxu0
    %389 = vmatprep.subr.mxu0 0.0
    %v390 = vand.u32 %v84, 4294901760
    %v391 = vsub.f32 %v84, %v390
    %v392 = vand.u32 %v391, 4294901760
    %393 = vmatpush1.msra.mxu0 %v392
    %394 = vmatprep.subr.mxu0 0.0
    %395 = vmatpush1.msra.mxu0 0.0
    %396 = vmatprep.subr.mxu0 0.0
    %397 = vmatpush1.msra.mxu0 0.0
    %398 = vmatprep.subr.mxu0 0.0
    %399 = vmatpush1.msra.mxu0 0.0
    %400 = vmatprep.subr.mxu0 0.0
    %401 = vmatpush1.msra.mxu0 0.0
    %402 = vmatprep.subr.mxu0 0.0
    %403 = vmatpush1.msra.mxu0 0.0
    %404 = vmatprep.subr.mxu0 0.0
    %405 = vmatpush1.msra.mxu0 0.0
    %406 = vmatprep.subr.mxu0 0.0
    %407 = vmatpush1.msra.mxu0 0.0
    %408 = vmatprep.subr.mxu0 0.0
    %409 = vmatpush1.msra.mxu0 0.0
    %410 = vmatprep.subr.mxu0 0.0
    %411 = vmatpush1.msra.mxu0 0.0
    %412 = vmatprep.subr.mxu0 0.0
    %413 = vmatpush1.msra.mxu0 0.0
    %414 = vmatprep.subr.mxu0 0.0
    %415 = vmatpush1.msra.mxu0 0.0
    %416 = vmatprep.subr.mxu0 0.0
    %417 = vmatpush1.msra.mxu0 0.0
    %418 = vmatprep.subr.mxu0 0.0
    %419 = vmatpush1.msra.mxu0 0.0
    %420 = vmatprep.subr.mxu0 0.0
    %421 = vmatpush1.msra.mxu0 0.0
    %422 = vmatprep.subr.mxu0 0.0
    %423 = vmatpush1.msra.mxu0 0.0
    %424 = vmatprep.subr.mxu0 0.0
    %425 = vmatpush1.msra.mxu0 0.0
    %426 = vmatprep.subr.mxu0 0.0
    %427 = vmatpush1.msra.mxu0 0.0
    %428 = vmatprep.subr.mxu0 0.0
    %429 = vmatpush1.msra.mxu0 0.0
    %430 = vmatprep.subr.mxu0 0.0
    %431 = vmatpush1.msra.mxu0 0.0
    %432 = vmatprep.subr.mxu0 0.0
    %433 = vmatpush1.msra.mxu0 0.0
    %434 = vmatprep.subr.mxu0 0.0
    %435 = vmatpush1.msra.mxu0 0.0
    %436 = vmatprep.subr.mxu0 0.0
    %437 = vmatpush1.msra.mxu0 0.0
    %438 = vmatprep.subr.mxu0 0.0
    %439 = vmatpush1.msra.mxu0 0.0
    %440 = vmatprep.subr.mxu0 0.0
    %441 = vmatpush1.msra.mxu0 0.0
    %442 = vmatprep.subr.mxu0 0.0
    %443 = vmatpush1.msra.mxu0 0.0
    %444 = vmatprep.subr.mxu0 0.0
    %445 = vmatpush1.msra.mxu0 0.0
    %446 = vmatprep.subr.mxu0 0.0
    %447 = vmatpush1.msra.mxu0 0.0
    %448 = vmatprep.subr.mxu0 0.0
    %449 = vmatpush1.msra.mxu0 0.0
    %450 = vmatprep.subr.mxu0 0.0
    %451 = vmatpush1.msra.mxu0 0.0
    %452 = vmatprep.subr.mxu0 0.0
    %453 = vmatpush1.msra.mxu0 0.0
    %454 = vmatprep.subr.mxu0 0.0
    %455 = vmatpush1.msra.mxu0 0.0
    %456 = vmatprep.mubr.f32.mxu0 0.0
    %v457 = vand.u32 %v87, 4294901760
    %458 = vmatmul.mubr.f32.gmra.mrb[0].mxu0 %v457
    %v459 = vpop.f32.mrb[0].mxu0
    %v460 = vadd.f32 %v386, %v459
    %v461 = vpop.f32.mrb[0].mxu0
    %462 = vdwg.mxu0
    %463 = vmatprep.subr.mxu0 0.0
    %v464 = vand.u32 %v84, 4294901760
    %465 = vmatpush1.msra.mxu0 %v464
    %466 = vmatprep.subr.mxu0 0.0
    %467 = vmatpush1.msra.mxu0 0.0
    %468 = vmatprep.subr.mxu0 0.0
    %469 = vmatpush1.msra.mxu0 0.0
    %470 = vmatprep.subr.mxu0 0.0
    %471 = vmatpush1.msra.mxu0 0.0
    %472 = vmatprep.subr.mxu0 0.0
    %473 = vmatpush1.msra.mxu0 0.0
    %474 = vmatprep.subr.mxu0 0.0
    %475 = vmatpush1.msra.mxu0 0.0
    %476 = vmatprep.subr.mxu0 0.0
    %477 = vmatpush1.msra.mxu0 0.0
    %478 = vmatprep.subr.mxu0 0.0
    %479 = vmatpush1.msra.mxu0 0.0
    %480 = vmatprep.subr.mxu0 0.0
    %481 = vmatpush1.msra.mxu0 0.0
    %482 = vmatprep.subr.mxu0 0.0
    %483 = vmatpush1.msra.mxu0 0.0
    %484 = vmatprep.subr.mxu0 0.0
    %485 = vmatpush1.msra.mxu0 0.0
    %486 = vmatprep.subr.mxu0 0.0
    %487 = vmatpush1.msra.mxu0 0.0
    %488 = vmatprep.subr.mxu0 0.0
    %489 = vmatpush1.msra.mxu0 0.0
    %490 = vmatprep.subr.mxu0 0.0
    %491 = vmatpush1.msra.mxu0 0.0
    %492 = vmatprep.subr.mxu0 0.0
    %493 = vmatpush1.msra.mxu0 0.0
    %494 = vmatprep.subr.mxu0 0.0
    %495 = vmatpush1.msra.mxu0 0.0
    %496 = vmatprep.subr.mxu0 0.0
    %497 = vmatpush1.msra.mxu0 0.0
    %498 = vmatprep.subr.mxu0 0.0
    %499 = vmatpush1.msra.mxu0 0.0
    %500 = vmatprep.subr.mxu0 0.0
    %501 = vmatpush1.msra.mxu0 0.0
    %502 = vmatprep.subr.mxu0 0.0
    %503 = vmatpush1.msra.mxu0 0.0
    %504 = vmatprep.subr.mxu0 0.0
    %505 = vmatpush1.msra.mxu0 0.0
    %506 = vmatprep.subr.mxu0 0.0
    %507 = vmatpush1.msra.mxu0 0.0
    %508 = vmatprep.subr.mxu0 0.0
    %509 = vmatpush1.msra.mxu0 0.0
    %510 = vmatprep.subr.mxu0 0.0
    %511 = vmatpush1.msra.mxu0 0.0
    %512 = vmatprep.subr.mxu0 0.0
    %513 = vmatpush1.msra.mxu0 0.0
    %514 = vmatprep.subr.mxu0 0.0
    %515 = vmatpush1.msra.mxu0 0.0
    %516 = vmatprep.subr.mxu0 0.0
    %517 = vmatpush1.msra.mxu0 0.0
    %518 = vmatprep.subr.mxu0 0.0
    %519 = vmatpush1.msra.mxu0 0.0
    %520 = vmatprep.subr.mxu0 0.0
    %521 = vmatpush1.msra.mxu0 0.0
    %522 = vmatprep.subr.mxu0 0.0
    %523 = vmatpush1.msra.mxu0 0.0
    %524 = vmatprep.subr.mxu0 0.0
    %525 = vmatpush1.msra.mxu0 0.0
    %526 = vmatprep.subr.mxu0 0.0
    %527 = vmatpush1.msra.mxu0 0.0
    %528 = vmatprep.mubr.f32.mxu0 0.0
    %v529 = vand.u32 %v87, 4294901760
    %530 = vmatmul.mubr.f32.gmra.mrb[0].mxu0 %v529
    %v531 = vpop.f32.mrb[0].mxu0
    %v532 = vadd.f32 %v460, %v531
    %v533 = vpop.f32.mrb[0].mxu0
    %534 = vdwg.mxu0
    %vm535 = vcmask 261120
    %v537 = vsel %vm535, %v78, 0
    %539 = vmatprep.subr.mxu0 0.0
    %v540 = vand.u32 %v80, 4294901760
    %541 = vmatpush1.msra.mxu0 %v540
    %542 = vmatprep.subr.mxu0 0.0
    %v543 = vand.u32 %v81, 4294901760
    %544 = vmatpush1.msra.mxu0 %v543
    %545 = vmatprep.subr.mxu0 0.0
    %v546 = vand.u32 %v82, 4294901760
    %547 = vmatpush1.msra.mxu0 %v546
    %548 = vmatprep.subr.mxu0 0.0
    %v549 = vand.u32 %v83, 4294901760
    %550 = vmatpush1.msra.mxu0 %v549
    %551 = vmatprep.subr.mxu0 0.0
    %552 = vmatpush1.msra.mxu0 0.0
    %553 = vmatprep.subr.mxu0 0.0
    %554 = vmatpush1.msra.mxu0 0.0
    %555 = vmatprep.subr.mxu0 0.0
    %556 = vmatpush1.msra.mxu0 0.0
    %557 = vmatprep.subr.mxu0 0.0
    %558 = vmatpush1.msra.mxu0 0.0
    %559 = vmatprep.subr.mxu0 0.0
    %560 = vmatpush1.msra.mxu0 0.0
    %561 = vmatprep.subr.mxu0 0.0
    %562 = vmatpush1.msra.mxu0 0.0
    %563 = vmatprep.subr.mxu0 0.0
    %564 = vmatpush1.msra.mxu0 0.0
    %565 = vmatprep.subr.mxu0 0.0
    %566 = vmatpush1.msra.mxu0 0.0
    %567 = vmatprep.subr.mxu0 0.0
    %568 = vmatpush1.msra.mxu0 0.0
    %569 = vmatprep.subr.mxu0 0.0
    %570 = vmatpush1.msra.mxu0 0.0
    %571 = vmatprep.subr.mxu0 0.0
    %572 = vmatpush1.msra.mxu0 0.0
    %573 = vmatprep.subr.mxu0 0.0
    %574 = vmatpush1.msra.mxu0 0.0
    %575 = vmatprep.subr.mxu0 0.0
    %576 = vmatpush1.msra.mxu0 0.0
    %577 = vmatprep.subr.mxu0 0.0
    %578 = vmatpush1.msra.mxu0 0.0
    %579 = vmatprep.subr.mxu0 0.0
    %580 = vmatpush1.msra.mxu0 0.0
    %581 = vmatprep.subr.mxu0 0.0
    %582 = vmatpush1.msra.mxu0 0.0
    %583 = vmatprep.subr.mxu0 0.0
    %584 = vmatpush1.msra.mxu0 0.0
    %585 = vmatprep.subr.mxu0 0.0
    %586 = vmatpush1.msra.mxu0 0.0
    %587 = vmatprep.subr.mxu0 0.0
    %588 = vmatpush1.msra.mxu0 0.0
    %589 = vmatprep.subr.mxu0 0.0
    %590 = vmatpush1.msra.mxu0 0.0
    %591 = vmatprep.subr.mxu0 0.0
    %592 = vmatpush1.msra.mxu0 0.0
    %593 = vmatprep.subr.mxu0 0.0
    %594 = vmatpush1.msra.mxu0 0.0
    %595 = vmatprep.subr.mxu0 0.0
    %596 = vmatpush1.msra.mxu0 0.0
    %597 = vmatprep.subr.mxu0 0.0
    %598 = vmatpush1.msra.mxu0 0.0
    %599 = vmatprep.subr.mxu0 0.0
    %600 = vmatpush1.msra.mxu0 0.0
    %601 = vmatprep.subr.mxu0 0.0
    %602 = vmatpush1.msra.mxu0 0.0
    %603 = vmatprep.subr.mxu0 0.0
    %604 = vmatpush1.msra.mxu0 0.0
    %605 = vmatprep.subr.mxu0 0.0
    %606 = vmatpush1.msra.mxu0 0.0
    %607 = vmatprep.mubr.f32.mxu0 0.0
    %v608 = vand.u32 %v537, 4294901760
    %v609 = vsub.f32 %v537, %v608
    %v610 = vand.u32 %v609, 4294901760
    %v611 = vsub.f32 %v609, %v610
    %v612 = vand.u32 %v611, 4294901760
    %613 = vmatmul.mubr.f32.gmra.mrb[0].mxu0 %v612
    %v614 = vpop.f32.mrb[0].mxu0
    %v615 = vadd.f32 %v532, %v614
    %v616 = vpop.f32.mrb[0].mxu0
    %617 = vdwg.mxu0
    %618 = vmatprep.subr.mxu0 0.0
    %v619 = vand.u32 %v80, 4294901760
    %v620 = vsub.f32 %v80, %v619
    %v621 = vand.u32 %v620, 4294901760
    %v622 = vsub.f32 %v620, %v621
    %v623 = vand.u32 %v622, 4294901760
    %624 = vmatpush1.msra.mxu0 %v623
    %625 = vmatprep.subr.mxu0 0.0
    %v626 = vand.u32 %v81, 4294901760
    %v627 = vsub.f32 %v81, %v626
    %v628 = vand.u32 %v627, 4294901760
    %v629 = vsub.f32 %v627, %v628
    %v630 = vand.u32 %v629, 4294901760
    %631 = vmatpush1.msra.mxu0 %v630
    %632 = vmatprep.subr.mxu0 0.0
    %v633 = vand.u32 %v82, 4294901760
    %v634 = vsub.f32 %v82, %v633
    %v635 = vand.u32 %v634, 4294901760
    %v636 = vsub.f32 %v634, %v635
    %v637 = vand.u32 %v636, 4294901760
    %638 = vmatpush1.msra.mxu0 %v637
    %639 = vmatprep.subr.mxu0 0.0
    %v640 = vand.u32 %v83, 4294901760
    %v641 = vsub.f32 %v83, %v640
    %v642 = vand.u32 %v641, 4294901760
    %v643 = vsub.f32 %v641, %v642
    %v644 = vand.u32 %v643, 4294901760
    %645 = vmatpush1.msra.mxu0 %v644
    %646 = vmatprep.subr.mxu0 0.0
    %647 = vmatpush1.msra.mxu0 0.0
    %648 = vmatprep.subr.mxu0 0.0
    %649 = vmatpush1.msra.mxu0 0.0
    %650 = vmatprep.subr.mxu0 0.0
    %651 = vmatpush1.msra.mxu0 0.0
    %652 = vmatprep.subr.mxu0 0.0
    %653 = vmatpush1.msra.mxu0 0.0
    %654 = vmatprep.subr.mxu0 0.0
    %655 = vmatpush1.msra.mxu0 0.0
    %656 = vmatprep.subr.mxu0 0.0
    %657 = vmatpush1.msra.mxu0 0.0
    %658 = vmatprep.subr.mxu0 0.0
    %659 = vmatpush1.msra.mxu0 0.0
    %660 = vmatprep.subr.mxu0 0.0
    %661 = vmatpush1.msra.mxu0 0.0
    %662 = vmatprep.subr.mxu0 0.0
    %663 = vmatpush1.msra.mxu0 0.0
    %664 = vmatprep.subr.mxu0 0.0
    %665 = vmatpush1.msra.mxu0 0.0
    %666 = vmatprep.subr.mxu0 0.0
    %667 = vmatpush1.msra.mxu0 0.0
    %668 = vmatprep.subr.mxu0 0.0
    %669 = vmatpush1.msra.mxu0 0.0
    %670 = vmatprep.subr.mxu0 0.0
    %671 = vmatpush1.msra.mxu0 0.0
    %672 = vmatprep.subr.mxu0 0.0
    %673 = vmatpush1.msra.mxu0 0.0
    %674 = vmatprep.subr.mxu0 0.0
    %675 = vmatpush1.msra.mxu0 0.0
    %676 = vmatprep.subr.mxu0 0.0
    %677 = vmatpush1.msra.mxu0 0.0
    %678 = vmatprep.subr.mxu0 0.0
    %679 = vmatpush1.msra.mxu0 0.0
    %680 = vmatprep.subr.mxu0 0.0
    %681 = vmatpush1.msra.mxu0 0.0
    %682 = vmatprep.subr.mxu0 0.0
    %683 = vmatpush1.msra.mxu0 0.0
    %684 = vmatprep.subr.mxu0 0.0
    %685 = vmatpush1.msra.mxu0 0.0
    %686 = vmatprep.subr.mxu0 0.0
    %687 = vmatpush1.msra.mxu0 0.0
    %688 = vmatprep.subr.mxu0 0.0
    %689 = vmatpush1.msra.mxu0 0.0
    %690 = vmatprep.subr.mxu0 0.0
    %691 = vmatpush1.msra.mxu0 0.0
    %692 = vmatprep.subr.mxu0 0.0
    %693 = vmatpush1.msra.mxu0 0.0
    %694 = vmatprep.subr.mxu0 0.0
    %695 = vmatpush1.msra.mxu0 0.0
    %696 = vmatprep.subr.mxu0 0.0
    %697 = vmatpush1.msra.mxu0 0.0
    %698 = vmatprep.subr.mxu0 0.0
    %699 = vmatpush1.msra.mxu0 0.0
    %700 = vmatprep.subr.mxu0 0.0
    %701 = vmatpush1.msra.mxu0 0.0
    %702 = vmatprep.mubr.f32.mxu0 0.0
    %v703 = vand.u32 %v537, 4294901760
    %704 = vmatmul.mubr.f32.gmra.mrb[0].mxu0 %v703
    %v705 = vpop.f32.mrb[0].mxu0
    %v706 = vadd.f32 %v615, %v705
    %v707 = vpop.f32.mrb[0].mxu0
    %708 = vdwg.mxu0
    %709 = vmatprep.subr.mxu0 0.0
    %v710 = vand.u32 %v80, 4294901760
    %v711 = vsub.f32 %v80, %v710
    %712 = vmatpush1.msra.mxu0 %v711
    %713 = vmatprep.subr.mxu0 0.0
    %v714 = vand.u32 %v81, 4294901760
    %v715 = vsub.f32 %v81, %v714
    %716 = vmatpush1.msra.mxu0 %v715
    %717 = vmatprep.subr.mxu0 0.0
    %v718 = vand.u32 %v82, 4294901760
    %v719 = vsub.f32 %v82, %v718
    %720 = vmatpush1.msra.mxu0 %v719
    %721 = vmatprep.subr.mxu0 0.0
    %v722 = vand.u32 %v83, 4294901760
    %v723 = vsub.f32 %v83, %v722
    %724 = vmatpush1.msra.mxu0 %v723
    %725 = vmatprep.subr.mxu0 0.0
    %726 = vmatpush1.msra.mxu0 0.0
    %727 = vmatprep.subr.mxu0 0.0
    %728 = vmatpush1.msra.mxu0 0.0
    %729 = vmatprep.subr.mxu0 0.0
    %730 = vmatpush1.msra.mxu0 0.0
    %731 = vmatprep.subr.mxu0 0.0
    %732 = vmatpush1.msra.mxu0 0.0
    %733 = vmatprep.subr.mxu0 0.0
    %734 = vmatpush1.msra.mxu0 0.0
    %735 = vmatprep.subr.mxu0 0.0
    %736 = vmatpush1.msra.mxu0 0.0
    %737 = vmatprep.subr.mxu0 0.0
    %738 = vmatpush1.msra.mxu0 0.0
    %739 = vmatprep.subr.mxu0 0.0
    %740 = vmatpush1.msra.mxu0 0.0
    %741 = vmatprep.subr.mxu0 0.0
    %742 = vmatpush1.msra.mxu0 0.0
    %743 = vmatprep.subr.mxu0 0.0
    %744 = vmatpush1.msra.mxu0 0.0
    %745 = vmatprep.subr.mxu0 0.0
    %746 = vmatpush1.msra.mxu0 0.0
    %747 = vmatprep.subr.mxu0 0.0
    %748 = vmatpush1.msra.mxu0 0.0
    %749 = vmatprep.subr.mxu0 0.0
    %750 = vmatpush1.msra.mxu0 0.0
    %751 = vmatprep.subr.mxu0 0.0
    %752 = vmatpush1.msra.mxu0 0.0
    %753 = vmatprep.subr.mxu0 0.0
    %754 = vmatpush1.msra.mxu0 0.0
    %755 = vmatprep.subr.mxu0 0.0
    %756 = vmatpush1.msra.mxu0 0.0
    %757 = vmatprep.subr.mxu0 0.0
    %758 = vmatpush1.msra.mxu0 0.0
    %759 = vmatprep.subr.mxu0 0.0
    %760 = vmatpush1.msra.mxu0 0.0
    %761 = vmatprep.subr.mxu0 0.0
    %762 = vmatpush1.msra.mxu0 0.0
    %763 = vmatprep.subr.mxu0 0.0
    %764 = vmatpush1.msra.mxu0 0.0
    %765 = vmatprep.subr.mxu0 0.0
    %766 = vmatpush1.msra.mxu0 0.0
    %767 = vmatprep.subr.mxu0 0.0
    %768 = vmatpush1.msra.mxu0 0.0
    %769 = vmatprep.subr.mxu0 0.0
    %770 = vmatpush1.msra.mxu0 0.0
    %771 = vmatprep.subr.mxu0 0.0
    %772 = vmatpush1.msra.mxu0 0.0
    %773 = vmatprep.subr.mxu0 0.0
    %774 = vmatpush1.msra.mxu0 0.0
    %775 = vmatprep.subr.mxu0 0.0
    %776 = vmatpush1.msra.mxu0 0.0
    %777 = vmatprep.subr.mxu0 0.0
    %778 = vmatpush1.msra.mxu0 0.0
    %779 = vmatprep.subr.mxu0 0.0
    %780 = vmatpush1.msra.mxu0 0.0
    %781 = vmatprep.mubr.f32.mxu0 0.0
    %v782 = vand.u32 %v537, 4294901760
    %v783 = vsub.f32 %v537, %v782
    %784 = vmatmul.mubr.f32.gmra.mrb[0].mxu0 %v783
    %v785 = vpop.f32.mrb[0].mxu0
    %v786 = vadd.f32 %v706, %v785
    %v787 = vpop.f32.mrb[0].mxu0
    %788 = vdwg.mxu0
    %789 = vmatprep.subr.mxu0 0.0
    %v790 = vand.u32 %v80, 4294901760
    %791 = vmatpush1.msra.mxu0 %v790
    %792 = vmatprep.subr.mxu0 0.0
    %v793 = vand.u32 %v81, 4294901760
    %794 = vmatpush1.msra.mxu0 %v793
    %795 = vmatprep.subr.mxu0 0.0
    %v796 = vand.u32 %v82, 4294901760
    %797 = vmatpush1.msra.mxu0 %v796
    %798 = vmatprep.subr.mxu0 0.0
    %v799 = vand.u32 %v83, 4294901760
    %800 = vmatpush1.msra.mxu0 %v799
    %801 = vmatprep.subr.mxu0 0.0
    %802 = vmatpush1.msra.mxu0 0.0
    %803 = vmatprep.subr.mxu0 0.0
    %804 = vmatpush1.msra.mxu0 0.0
    %805 = vmatprep.subr.mxu0 0.0
    %806 = vmatpush1.msra.mxu0 0.0
    %807 = vmatprep.subr.mxu0 0.0
    %808 = vmatpush1.msra.mxu0 0.0
    %809 = vmatprep.subr.mxu0 0.0
    %810 = vmatpush1.msra.mxu0 0.0
    %811 = vmatprep.subr.mxu0 0.0
    %812 = vmatpush1.msra.mxu0 0.0
    %813 = vmatprep.subr.mxu0 0.0
    %814 = vmatpush1.msra.mxu0 0.0
    %815 = vmatprep.subr.mxu0 0.0
    %816 = vmatpush1.msra.mxu0 0.0
    %817 = vmatprep.subr.mxu0 0.0
    %818 = vmatpush1.msra.mxu0 0.0
    %819 = vmatprep.subr.mxu0 0.0
    %820 = vmatpush1.msra.mxu0 0.0
    %821 = vmatprep.subr.mxu0 0.0
    %822 = vmatpush1.msra.mxu0 0.0
    %823 = vmatprep.subr.mxu0 0.0
    %824 = vmatpush1.msra.mxu0 0.0
    %825 = vmatprep.subr.mxu0 0.0
    %826 = vmatpush1.msra.mxu0 0.0
    %827 = vmatprep.subr.mxu0 0.0
    %828 = vmatpush1.msra.mxu0 0.0
    %829 = vmatprep.subr.mxu0 0.0
    %830 = vmatpush1.msra.mxu0 0.0
    %831 = vmatprep.subr.mxu0 0.0
    %832 = vmatpush1.msra.mxu0 0.0
    %833 = vmatprep.subr.mxu0 0.0
    %834 = vmatpush1.msra.mxu0 0.0
    %835 = vmatprep.subr.mxu0 0.0
    %836 = vmatpush1.msra.mxu0 0.0
    %837 = vmatprep.subr.mxu0 0.0
    %838 = vmatpush1.msra.mxu0 0.0
    %839 = vmatprep.subr.mxu0 0.0
    %840 = vmatpush1.msra.mxu0 0.0
    %841 = vmatprep.subr.mxu0 0.0
    %842 = vmatpush1.msra.mxu0 0.0
    %843 = vmatprep.subr.mxu0 0.0
    %844 = vmatpush1.msra.mxu0 0.0
    %845 = vmatprep.subr.mxu0 0.0
    %846 = vmatpush1.msra.mxu0 0.0
    %847 = vmatprep.subr.mxu0 0.0
    %848 = vmatpush1.msra.mxu0 0.0
    %849 = vmatprep.subr.mxu0 0.0
    %850 = vmatpush1.msra.mxu0 0.0
    %851 = vmatprep.subr.mxu0 0.0
    %852 = vmatpush1.msra.mxu0 0.0
    %853 = vmatprep.subr.mxu0 0.0
    %854 = vmatpush1.msra.mxu0 0.0
    %855 = vmatprep.subr.mxu0 0.0
    %856 = vmatpush1.msra.mxu0 0.0
    %857 = vmatprep.mubr.f32.mxu0 0.0
    %v858 = vand.u32 %v537, 4294901760
    %v859 = vsub.f32 %v537, %v858
    %v860 = vand.u32 %v859, 4294901760
    %861 = vmatmul.mubr.f32.gmra.mrb[0].mxu0 %v860
    %v862 = vpop.f32.mrb[0].mxu0
    %v863 = vadd.f32 %v786, %v862
    %v864 = vpop.f32.mrb[0].mxu0
    %865 = vdwg.mxu0
    %866 = vmatprep.subr.mxu0 0.0
    %v867 = vand.u32 %v80, 4294901760
    %v868 = vsub.f32 %v80, %v867
    %v869 = vand.u32 %v868, 4294901760
    %870 = vmatpush1.msra.mxu0 %v869
    %871 = vmatprep.subr.mxu0 0.0
    %v872 = vand.u32 %v81, 4294901760
    %v873 = vsub.f32 %v81, %v872
    %v874 = vand.u32 %v873, 4294901760
    %875 = vmatpush1.msra.mxu0 %v874
    %876 = vmatprep.subr.mxu0 0.0
    %v877 = vand.u32 %v82, 4294901760
    %v878 = vsub.f32 %v82, %v877
    %v879 = vand.u32 %v878, 4294901760
    %880 = vmatpush1.msra.mxu0 %v879
    %881 = vmatprep.subr.mxu0 0.0
    %v882 = vand.u32 %v83, 4294901760
    %v883 = vsub.f32 %v83, %v882
    %v884 = vand.u32 %v883, 4294901760
    %885 = vmatpush1.msra.mxu0 %v884
    %886 = vmatprep.subr.mxu0 0.0
    %887 = vmatpush1.msra.mxu0 0.0
    %888 = vmatprep.subr.mxu0 0.0
    %889 = vmatpush1.msra.mxu0 0.0
    %890 = vmatprep.subr.mxu0 0.0
    %891 = vmatpush1.msra.mxu0 0.0
    %892 = vmatprep.subr.mxu0 0.0
    %893 = vmatpush1.msra.mxu0 0.0
    %894 = vmatprep.subr.mxu0 0.0
    %895 = vmatpush1.msra.mxu0 0.0
    %896 = vmatprep.subr.mxu0 0.0
    %897 = vmatpush1.msra.mxu0 0.0
    %898 = vmatprep.subr.mxu0 0.0
    %899 = vmatpush1.msra.mxu0 0.0
    %900 = vmatprep.subr.mxu0 0.0
    %901 = vmatpush1.msra.mxu0 0.0
    %902 = vmatprep.subr.mxu0 0.0
    %903 = vmatpush1.msra.mxu0 0.0
    %904 = vmatprep.subr.mxu0 0.0
    %905 = vmatpush1.msra.mxu0 0.0
    %906 = vmatprep.subr.mxu0 0.0
    %907 = vmatpush1.msra.mxu0 0.0
    %908 = vmatprep.subr.mxu0 0.0
    %909 = vmatpush1.msra.mxu0 0.0
    %910 = vmatprep.subr.mxu0 0.0
    %911 = vmatpush1.msra.mxu0 0.0
    %912 = vmatprep.subr.mxu0 0.0
    %913 = vmatpush1.msra.mxu0 0.0
    %914 = vmatprep.subr.mxu0 0.0
    %915 = vmatpush1.msra.mxu0 0.0
    %916 = vmatprep.subr.mxu0 0.0
    %917 = vmatpush1.msra.mxu0 0.0
    %918 = vmatprep.subr.mxu0 0.0
    %919 = vmatpush1.msra.mxu0 0.0
    %920 = vmatprep.subr.mxu0 0.0
    %921 = vmatpush1.msra.mxu0 0.0
    %922 = vmatprep.subr.mxu0 0.0
    %923 = vmatpush1.msra.mxu0 0.0
    %924 = vmatprep.subr.mxu0 0.0
    %925 = vmatpush1.msra.mxu0 0.0
    %926 = vmatprep.subr.mxu0 0.0
    %927 = vmatpush1.msra.mxu0 0.0
    %928 = vmatprep.subr.mxu0 0.0
    %929 = vmatpush1.msra.mxu0 0.0
    %930 = vmatprep.subr.mxu0 0.0
    %931 = vmatpush1.msra.mxu0 0.0
    %932 = vmatprep.subr.mxu0 0.0
    %933 = vmatpush1.msra.mxu0 0.0
    %934 = vmatprep.subr.mxu0 0.0
    %935 = vmatpush1.msra.mxu0 0.0
    %936 = vmatprep.subr.mxu0 0.0
    %937 = vmatpush1.msra.mxu0 0.0
    %938 = vmatprep.subr.mxu0 0.0
    %939 = vmatpush1.msra.mxu0 0.0
    %940 = vmatprep.subr.mxu0 0.0
    %941 = vmatpush1.msra.mxu0 0.0
    %942 = vmatprep.mubr.f32.mxu0 0.0
    %v943 = vand.u32 %v537, 4294901760
    %944 = vmatmul.mubr.f32.gmra.mrb[0].mxu0 %v943
    %v945 = vpop.f32.mrb[0].mxu0
    %v946 = vadd.f32 %v863, %v945
    %v947 = vpop.f32.mrb[0].mxu0
    %948 = vdwg.mxu0
    %949 = vmatprep.subr.mxu0 0.0
    %v950 = vand.u32 %v80, 4294901760
    %951 = vmatpush1.msra.mxu0 %v950
    %952 = vmatprep.subr.mxu0 0.0
    %v953 = vand.u32 %v81, 4294901760
    %954 = vmatpush1.msra.mxu0 %v953
    %955 = vmatprep.subr.mxu0 0.0
    %v956 = vand.u32 %v82, 4294901760
    %957 = vmatpush1.msra.mxu0 %v956
    %958 = vmatprep.subr.mxu0 0.0
    %v959 = vand.u32 %v83, 4294901760
    %960 = vmatpush1.msra.mxu0 %v959
    %961 = vmatprep.subr.mxu0 0.0
    %962 = vmatpush1.msra.mxu0 0.0
    %963 = vmatprep.subr.mxu0 0.0
    %964 = vmatpush1.msra.mxu0 0.0
    %965 = vmatprep.subr.mxu0 0.0
    %966 = vmatpush1.msra.mxu0 0.0
    %967 = vmatprep.subr.mxu0 0.0
    %968 = vmatpush1.msra.mxu0 0.0
    %969 = vmatprep.subr.mxu0 0.0
    %970 = vmatpush1.msra.mxu0 0.0
    %971 = vmatprep.subr.mxu0 0.0
    %972 = vmatpush1.msra.mxu0 0.0
    %973 = vmatprep.subr.mxu0 0.0
    %974 = vmatpush1.msra.mxu0 0.0
    %975 = vmatprep.subr.mxu0 0.0
    %976 = vmatpush1.msra.mxu0 0.0
    %977 = vmatprep.subr.mxu0 0.0
    %978 = vmatpush1.msra.mxu0 0.0
    %979 = vmatprep.subr.mxu0 0.0
    %980 = vmatpush1.msra.mxu0 0.0
    %981 = vmatprep.subr.mxu0 0.0
    %982 = vmatpush1.msra.mxu0 0.0
    %983 = vmatprep.subr.mxu0 0.0
    %984 = vmatpush1.msra.mxu0 0.0
    %985 = vmatprep.subr.mxu0 0.0
    %986 = vmatpush1.msra.mxu0 0.0
    %987 = vmatprep.subr.mxu0 0.0
    %988 = vmatpush1.msra.mxu0 0.0
    %989 = vmatprep.subr.mxu0 0.0
    %990 = vmatpush1.msra.mxu0 0.0
    %991 = vmatprep.subr.mxu0 0.0
    %992 = vmatpush1.msra.mxu0 0.0
    %993 = vmatprep.subr.mxu0 0.0
    %994 = vmatpush1.msra.mxu0 0.0
    %995 = vmatprep.subr.mxu0 0.0
    %996 = vmatpush1.msra.mxu0 0.0
    %997 = vmatprep.subr.mxu0 0.0
    %998 = vmatpush1.msra.mxu0 0.0
    %999 = vmatprep.subr.mxu0 0.0
    %1000 = vmatpush1.msra.mxu0 0.0
    %1001 = vmatprep.subr.mxu0 0.0
    %1002 = vmatpush1.msra.mxu0 0.0
    %1003 = vmatprep.subr.mxu0 0.0
    %1004 = vmatpush1.msra.mxu0 0.0
    %1005 = vmatprep.subr.mxu0 0.0
    %1006 = vmatpush1.msra.mxu0 0.0
    %1007 = vmatprep.subr.mxu0 0.0
    %1008 = vmatpush1.msra.mxu0 0.0
    %1009 = vmatprep.subr.mxu0 0.0
    %1010 = vmatpush1.msra.mxu0 0.0
    %1011 = vmatprep.subr.mxu0 0.0
    %1012 = vmatpush1.msra.mxu0 0.0
    %1013 = vmatprep.subr.mxu0 0.0
    %1014 = vmatpush1.msra.mxu0 0.0
    %1015 = vmatprep.subr.mxu0 0.0
    %1016 = vmatpush1.msra.mxu0 0.0
    %1017 = vmatprep.mubr.f32.mxu0 0.0
    %v1018 = vand.u32 %v537, 4294901760
    %1019 = vmatmul.mubr.f32.gmra.mrb[0].mxu0 %v1018
    %v1020 = vpop.f32.mrb[0].mxu0
    %v1021 = vadd.f32 %v946, %v1020
    %v1022 = vpop.f32.mrb[0].mxu0
    %1023 = vdwg.mxu0
    %v1024 = vld [vmem:[%s4] sm:$0x1]
    %v1026 = vlaneseq
    %v1027 = vshrl.u32 %v1026, 7
    %v1028 = vsub.s32 0, %v1027
    %v1029 = vrot.slane %v1024, %v1028
    %v1031 = vadd.f32 %v1021, %v1029
    %v1032 = vmax.f32 %v1031, 0.0
    %v1033 = vld [vmem:[#allocation8] sm:$0xff]
    %v1034 = vld [vmem:[#allocation8 + $0x8] sm:$0xff]
    %v1035 = vld [vmem:[#allocation8 + $0x10] sm:$0xff]
    %v1036 = vld [vmem:[#allocation8 + $0x18] sm:$0xff]
    %v1037 = vld [vmem:[#allocation8 + $0x20] sm:$0xff]
    %v1038 = vld [vmem:[#allocation8 + $0x28] sm:$0xff]
    %v1039 = vld [vmem:[#allocation8 + $0x30] sm:$0xff]
    %v1040 = vld [vmem:[#allocation8 + $0x38] sm:$0xff]
    %v1041 = vld [vmem:[#allocation8 + $0x40] sm:$0xff]
    %v1042 = vld [vmem:[#allocation8 + $0x48] sm:$0xff]
    %v1043 = vld [vmem:[#allocation8 + $0x50] sm:$0xff]
    %v1044 = vld [vmem:[#allocation8 + $0x58] sm:$0xff]
    %v1045 = vld [vmem:[#allocation8 + $0x60] sm:$0xff]
    %v1046 = vld [vmem:[#allocation8 + $0x68] sm:$0xff]
    %v1047 = vld [vmem:[#allocation8 + $0x70] sm:$0xff]
    %v1048 = vld [vmem:[#allocation8 + $0x78] sm:$0xff]
    %v1049 = vld [vmem:[%s6] sm:$0x1]
    %v1051 = vlaneseq
    %v1052 = vshrl.u32 %v1051, 7
    %v1053 = vsub.s32 0, %v1052
    %v1054 = vrot.slane %v1049, %v1053
    %1056 = vmatprep.subr.mxu0 0.0
    %v1057 = vand.u32 %v1033, 4294901760
    %1058 = vmatpush1.msra.mxu0 %v1057
    %1059 = vmatprep.subr.mxu0 0.0
    %v1060 = vand.u32 %v1034, 4294901760
    %1061 = vmatpush1.msra.mxu0 %v1060
    %1062 = vmatprep.subr.mxu0 0.0
    %v1063 = vand.u32 %v1035, 4294901760
    %1064 = vmatpush1.msra.mxu0 %v1063
    %1065 = vmatprep.subr.mxu0 0.0
    %v1066 = vand.u32 %v1036, 4294901760
    %1067 = vmatpush1.msra.mxu0 %v1066
    %1068 = vmatprep.subr.mxu0 0.0
    %v1069 = vand.u32 %v1037, 4294901760
    %1070 = vmatpush1.msra.mxu0 %v1069
    %1071 = vmatprep.subr.mxu0 0.0
    %v1072 = vand.u32 %v1038, 4294901760
    %1073 = vmatpush1.msra.mxu0 %v1072
    %1074 = vmatprep.subr.mxu0 0.0
    %v1075 = vand.u32 %v1039, 4294901760
    %1076 = vmatpush1.msra.mxu0 %v1075
    %1077 = vmatprep.subr.mxu0 0.0
    %v1078 = vand.u32 %v1040, 4294901760
    %1079 = vmatpush1.msra.mxu0 %v1078
    %1080 = vmatprep.subr.mxu0 0.0
    %v1081 = vand.u32 %v1041, 4294901760
    %1082 = vmatpush1.msra.mxu0 %v1081
    %1083 = vmatprep.subr.mxu0 0.0
    %v1084 = vand.u32 %v1042, 4294901760
    %1085 = vmatpush1.msra.mxu0 %v1084
    %1086 = vmatprep.subr.mxu0 0.0
    %v1087 = vand.u32 %v1043, 4294901760
    %1088 = vmatpush1.msra.mxu0 %v1087
    %1089 = vmatprep.subr.mxu0 0.0
    %v1090 = vand.u32 %v1044, 4294901760
    %1091 = vmatpush1.msra.mxu0 %v1090
    %1092 = vmatprep.subr.mxu0 0.0
    %v1093 = vand.u32 %v1045, 4294901760
    %1094 = vmatpush1.msra.mxu0 %v1093
    %1095 = vmatprep.subr.mxu0 0.0
    %v1096 = vand.u32 %v1046, 4294901760
    %1097 = vmatpush1.msra.mxu0 %v1096
    %1098 = vmatprep.subr.mxu0 0.0
    %v1099 = vand.u32 %v1047, 4294901760
    %1100 = vmatpush1.msra.mxu0 %v1099
    %1101 = vmatprep.subr.mxu0 0.0
    %v1102 = vand.u32 %v1048, 4294901760
    %1103 = vmatpush1.msra.mxu0 %v1102
    %1104 = vmatprep.subr.mxu0 0.0
    %1105 = vmatpush1.msra.mxu0 0.0
    %1106 = vmatprep.subr.mxu0 0.0
    %1107 = vmatpush1.msra.mxu0 0.0
    %1108 = vmatprep.subr.mxu0 0.0
    %1109 = vmatpush1.msra.mxu0 0.0
    %1110 = vmatprep.subr.mxu0 0.0
    %1111 = vmatpush1.msra.mxu0 0.0
    %1112 = vmatprep.subr.mxu0 0.0
    %1113 = vmatpush1.msra.mxu0 0.0
    %1114 = vmatprep.subr.mxu0 0.0
    %1115 = vmatpush1.msra.mxu0 0.0
    %1116 = vmatprep.subr.mxu0 0.0
    %1117 = vmatpush1.msra.mxu0 0.0
    %1118 = vmatprep.subr.mxu0 0.0
    %1119 = vmatpush1.msra.mxu0 0.0
    %1120 = vmatprep.subr.mxu0 0.0
    %1121 = vmatpush1.msra.mxu0 0.0
    %1122 = vmatprep.subr.mxu0 0.0
    %1123 = vmatpush1.msra.mxu0 0.0
    %1124 = vmatprep.subr.mxu0 0.0
    %1125 = vmatpush1.msra.mxu0 0.0
    %1126 = vmatprep.subr.mxu0 0.0
    %1127 = vmatpush1.msra.mxu0 0.0
    %1128 = vmatprep.subr.mxu0 0.0
    %1129 = vmatpush1.msra.mxu0 0.0
    %1130 = vmatprep.subr.mxu0 0.0
    %1131 = vmatpush1.msra.mxu0 0.0
    %1132 = vmatprep.subr.mxu0 0.0
    %1133 = vmatpush1.msra.mxu0 0.0
    %1134 = vmatprep.subr.mxu0 0.0
    %1135 = vmatpush1.msra.mxu0 0.0
    %1136 = vmatprep.mubr.f32.mxu0 0.0
    %v1137 = vand.u32 %v1032, 4294901760
    %v1138 = vsub.f32 %v1032, %v1137
    %v1139 = vand.u32 %v1138, 4294901760
    %v1140 = vsub.f32 %v1138, %v1139
    %v1141 = vand.u32 %v1140, 4294901760
    %1142 = vmatmul.mubr.f32.gmra.mrb[0].mxu0 %v1141
    %v1143 = vpop.f32.mrb[0].mxu0
    %v1144 = vadd.f32 %v1054, %v1143
    %v1145 = vpop.f32.mrb[0].mxu0
    %1146 = vdwg.mxu0
    %1147 = vmatprep.subr.mxu0 0.0
    %v1148 = vand.u32 %v1033, 4294901760
    %v1149 = vsub.f32 %v1033, %v1148
    %v1150 = vand.u32 %v1149, 4294901760
    %v1151 = vsub.f32 %v1149, %v1150
    %v1152 = vand.u32 %v1151, 4294901760
    %1153 = vmatpush1.msra.mxu0 %v1152
    %1154 = vmatprep.subr.mxu0 0.0
    %v1155 = vand.u32 %v1034, 4294901760
    %v1156 = vsub.f32 %v1034, %v1155
    %v1157 = vand.u32 %v1156, 4294901760
    %v1158 = vsub.f32 %v1156, %v1157
    %v1159 = vand.u32 %v1158, 4294901760
    %1160 = vmatpush1.msra.mxu0 %v1159
    %1161 = vmatprep.subr.mxu0 0.0
    %v1162 = vand.u32 %v1035, 4294901760
    %v1163 = vsub.f32 %v1035, %v1162
    %v1164 = vand.u32 %v1163, 4294901760
    %v1165 = vsub.f32 %v1163, %v1164
    %v1166 = vand.u32 %v1165, 4294901760
    %1167 = vmatpush1.msra.mxu0 %v1166
    %1168 = vmatprep.subr.mxu0 0.0
    %v1169 = vand.u32 %v1036, 4294901760
    %v1170 = vsub.f32 %v1036, %v1169
    %v1171 = vand.u32 %v1170, 4294901760
    %v1172 = vsub.f32 %v1170, %v1171
    %v1173 = vand.u32 %v1172, 4294901760
    %1174 = vmatpush1.msra.mxu0 %v1173
    %1175 = vmatprep.subr.mxu0 0.0
    %v1176 = vand.u32 %v1037, 4294901760
    %v1177 = vsub.f32 %v1037, %v1176
    %v1178 = vand.u32 %v1177, 4294901760
    %v1179 = vsub.f32 %v1177, %v1178
    %v1180 = vand.u32 %v1179, 4294901760
    %1181 = vmatpush1.msra.mxu0 %v1180
    %1182 = vmatprep.subr.mxu0 0.0
    %v1183 = vand.u32 %v1038, 4294901760
    %v1184 = vsub.f32 %v1038, %v1183
    %v1185 = vand.u32 %v1184, 4294901760
    %v1186 = vsub.f32 %v1184, %v1185
    %v1187 = vand.u32 %v1186, 4294901760
    %1188 = vmatpush1.msra.mxu0 %v1187
    %1189 = vmatprep.subr.mxu0 0.0
    %v1190 = vand.u32 %v1039, 4294901760
    %v1191 = vsub.f32 %v1039, %v1190
    %v1192 = vand.u32 %v1191, 4294901760
    %v1193 = vsub.f32 %v1191, %v1192
    %v1194 = vand.u32 %v1193, 4294901760
    %1195 = vmatpush1.msra.mxu0 %v1194
    %1196 = vmatprep.subr.mxu0 0.0
    %v1197 = vand.u32 %v1040, 4294901760
    %v1198 = vsub.f32 %v1040, %v1197
    %v1199 = vand.u32 %v1198, 4294901760
    %v1200 = vsub.f32 %v1198, %v1199
    %v1201 = vand.u32 %v1200, 4294901760
    %1202 = vmatpush1.msra.mxu0 %v1201
    %1203 = vmatprep.subr.mxu0 0.0
    %v1204 = vand.u32 %v1041, 4294901760
    %v1205 = vsub.f32 %v1041, %v1204
    %v1206 = vand.u32 %v1205, 4294901760
    %v1207 = vsub.f32 %v1205, %v1206
    %v1208 = vand.u32 %v1207, 4294901760
    %1209 = vmatpush1.msra.mxu0 %v1208
    %1210 = vmatprep.subr.mxu0 0.0
    %v1211 = vand.u32 %v1042, 4294901760
    %v1212 = vsub.f32 %v1042, %v1211
    %v1213 = vand.u32 %v1212, 4294901760
    %v1214 = vsub.f32 %v1212, %v1213
    %v1215 = vand.u32 %v1214, 4294901760
    %1216 = vmatpush1.msra.mxu0 %v1215
    %1217 = vmatprep.subr.mxu0 0.0
    %v1218 = vand.u32 %v1043, 4294901760
    %v1219 = vsub.f32 %v1043, %v1218
    %v1220 = vand.u32 %v1219, 4294901760
    %v1221 = vsub.f32 %v1219, %v1220
    %v1222 = vand.u32 %v1221, 4294901760
    %1223 = vmatpush1.msra.mxu0 %v1222
    %1224 = vmatprep.subr.mxu0 0.0
    %v1225 = vand.u32 %v1044, 4294901760
    %v1226 = vsub.f32 %v1044, %v1225
    %v1227 = vand.u32 %v1226, 4294901760
    %v1228 = vsub.f32 %v1226, %v1227
    %v1229 = vand.u32 %v1228, 4294901760
    %1230 = vmatpush1.msra.mxu0 %v1229
    %1231 = vmatprep.subr.mxu0 0.0
    %v1232 = vand.u32 %v1045, 4294901760
    %v1233 = vsub.f32 %v1045, %v1232
    %v1234 = vand.u32 %v1233, 4294901760
    %v1235 = vsub.f32 %v1233, %v1234
    %v1236 = vand.u32 %v1235, 4294901760
    %1237 = vmatpush1.msra.mxu0 %v1236
    %1238 = vmatprep.subr.mxu0 0.0
    %v1239 = vand.u32 %v1046, 4294901760
    %v1240 = vsub.f32 %v1046, %v1239
    %v1241 = vand.u32 %v1240, 4294901760
    %v1242 = vsub.f32 %v1240, %v1241
    %v1243 = vand.u32 %v1242, 4294901760
    %1244 = vmatpush1.msra.mxu0 %v1243
    %1245 = vmatprep.subr.mxu0 0.0
    %v1246 = vand.u32 %v1047, 4294901760
    %v1247 = vsub.f32 %v1047, %v1246
    %v1248 = vand.u32 %v1247, 4294901760
    %v1249 = vsub.f32 %v1247, %v1248
    %v1250 = vand.u32 %v1249, 4294901760
    %1251 = vmatpush1.msra.mxu0 %v1250
    %1252 = vmatprep.subr.mxu0 0.0
    %v1253 = vand.u32 %v1048, 4294901760
    %v1254 = vsub.f32 %v1048, %v1253
    %v1255 = vand.u32 %v1254, 4294901760
    %v1256 = vsub.f32 %v1254, %v1255
    %v1257 = vand.u32 %v1256, 4294901760
    %1258 = vmatpush1.msra.mxu0 %v1257
    %1259 = vmatprep.subr.mxu0 0.0
    %1260 = vmatpush1.msra.mxu0 0.0
    %1261 = vmatprep.subr.mxu0 0.0
    %1262 = vmatpush1.msra.mxu0 0.0
    %1263 = vmatprep.subr.mxu0 0.0
    %1264 = vmatpush1.msra.mxu0 0.0
    %1265 = vmatprep.subr.mxu0 0.0
    %1266 = vmatpush1.msra.mxu0 0.0
    %1267 = vmatprep.subr.mxu0 0.0
    %1268 = vmatpush1.msra.mxu0 0.0
    %1269 = vmatprep.subr.mxu0 0.0
    %1270 = vmatpush1.msra.mxu0 0.0
    %1271 = vmatprep.subr.mxu0 0.0
    %1272 = vmatpush1.msra.mxu0 0.0
    %1273 = vmatprep.subr.mxu0 0.0
    %1274 = vmatpush1.msra.mxu0 0.0
    %1275 = vmatprep.subr.mxu0 0.0
    %1276 = vmatpush1.msra.mxu0 0.0
    %1277 = vmatprep.subr.mxu0 0.0
    %1278 = vmatpush1.msra.mxu0 0.0
    %1279 = vmatprep.subr.mxu0 0.0
    %1280 = vmatpush1.msra.mxu0 0.0
    %1281 = vmatprep.subr.mxu0 0.0
    %1282 = vmatpush1.msra.mxu0 0.0
    %1283 = vmatprep.subr.mxu0 0.0
    %1284 = vmatpush1.msra.mxu0 0.0
    %1285 = vmatprep.subr.mxu0 0.0
    %1286 = vmatpush1.msra.mxu0 0.0
    %1287 = vmatprep.subr.mxu0 0.0
    %1288 = vmatpush1.msra.mxu0 0.0
    %1289 = vmatprep.subr.mxu0 0.0
    %1290 = vmatpush1.msra.mxu0 0.0
    %1291 = vmatprep.mubr.f32.mxu0 0.0
    %v1292 = vand.u32 %v1032, 4294901760
    %1293 = vmatmul.mubr.f32.gmra.mrb[0].mxu0 %v1292
    %v1294 = vpop.f32.mrb[0].mxu0
    %v1295 = vadd.f32 %v1144, %v1294
    %v1296 = vpop.f32.mrb[0].mxu0
    %1297 = vdwg.mxu0
    %1298 = vmatprep.subr.mxu0 0.0
    %v1299 = vand.u32 %v1033, 4294901760
    %v1300 = vsub.f32 %v1033, %v1299
    %1301 = vmatpush1.msra.mxu0 %v1300
    %1302 = vmatprep.subr.mxu0 0.0
    %v1303 = vand.u32 %v1034, 4294901760
    %v1304 = vsub.f32 %v1034, %v1303
    %1305 = vmatpush1.msra.mxu0 %v1304
    %1306 = vmatprep.subr.mxu0 0.0
    %v1307 = vand.u32 %v1035, 4294901760
    %v1308 = vsub.f32 %v1035, %v1307
    %1309 = vmatpush1.msra.mxu0 %v1308
    %1310 = vmatprep.subr.mxu0 0.0
    %v1311 = vand.u32 %v1036, 4294901760
    %v1312 = vsub.f32 %v1036, %v1311
    %1313 = vmatpush1.msra.mxu0 %v1312
    %1314 = vmatprep.subr.mxu0 0.0
    %v1315 = vand.u32 %v1037, 4294901760
    %v1316 = vsub.f32 %v1037, %v1315
    %1317 = vmatpush1.msra.mxu0 %v1316
    %1318 = vmatprep.subr.mxu0 0.0
    %v1319 = vand.u32 %v1038, 4294901760
    %v1320 = vsub.f32 %v1038, %v1319
    %1321 = vmatpush1.msra.mxu0 %v1320
    %1322 = vmatprep.subr.mxu0 0.0
    %v1323 = vand.u32 %v1039, 4294901760
    %v1324 = vsub.f32 %v1039, %v1323
    %1325 = vmatpush1.msra.mxu0 %v1324
    %1326 = vmatprep.subr.mxu0 0.0
    %v1327 = vand.u32 %v1040, 4294901760
    %v1328 = vsub.f32 %v1040, %v1327
    %1329 = vmatpush1.msra.mxu0 %v1328
    %1330 = vmatprep.subr.mxu0 0.0
    %v1331 = vand.u32 %v1041, 4294901760
    %v1332 = vsub.f32 %v1041, %v1331
    %1333 = vmatpush1.msra.mxu0 %v1332
    %1334 = vmatprep.subr.mxu0 0.0
    %v1335 = vand.u32 %v1042, 4294901760
    %v1336 = vsub.f32 %v1042, %v1335
    %1337 = vmatpush1.msra.mxu0 %v1336
    %1338 = vmatprep.subr.mxu0 0.0
    %v1339 = vand.u32 %v1043, 4294901760
    %v1340 = vsub.f32 %v1043, %v1339
    %1341 = vmatpush1.msra.mxu0 %v1340
    %1342 = vmatprep.subr.mxu0 0.0
    %v1343 = vand.u32 %v1044, 4294901760
    %v1344 = vsub.f32 %v1044, %v1343
    %1345 = vmatpush1.msra.mxu0 %v1344
    %1346 = vmatprep.subr.mxu0 0.0
    %v1347 = vand.u32 %v1045, 4294901760
    %v1348 = vsub.f32 %v1045, %v1347
    %1349 = vmatpush1.msra.mxu0 %v1348
    %1350 = vmatprep.subr.mxu0 0.0
    %v1351 = vand.u32 %v1046, 4294901760
    %v1352 = vsub.f32 %v1046, %v1351
    %1353 = vmatpush1.msra.mxu0 %v1352
    %1354 = vmatprep.subr.mxu0 0.0
    %v1355 = vand.u32 %v1047, 4294901760
    %v1356 = vsub.f32 %v1047, %v1355
    %1357 = vmatpush1.msra.mxu0 %v1356
    %1358 = vmatprep.subr.mxu0 0.0
    %v1359 = vand.u32 %v1048, 4294901760
    %v1360 = vsub.f32 %v1048, %v1359
    %1361 = vmatpush1.msra.mxu0 %v1360
    %1362 = vmatprep.subr.mxu0 0.0
    %1363 = vmatpush1.msra.mxu0 0.0
    %1364 = vmatprep.subr.mxu0 0.0
    %1365 = vmatpush1.msra.mxu0 0.0
    %1366 = vmatprep.subr.mxu0 0.0
    %1367 = vmatpush1.msra.mxu0 0.0
    %1368 = vmatprep.subr.mxu0 0.0
    %1369 = vmatpush1.msra.mxu0 0.0
    %1370 = vmatprep.subr.mxu0 0.0
    %1371 = vmatpush1.msra.mxu0 0.0
    %1372 = vmatprep.subr.mxu0 0.0
    %1373 = vmatpush1.msra.mxu0 0.0
    %1374 = vmatprep.subr.mxu0 0.0
    %1375 = vmatpush1.msra.mxu0 0.0
    %1376 = vmatprep.subr.mxu0 0.0
    %1377 = vmatpush1.msra.mxu0 0.0
    %1378 = vmatprep.subr.mxu0 0.0
    %1379 = vmatpush1.msra.mxu0 0.0
    %1380 = vmatprep.subr.mxu0 0.0
    %1381 = vmatpush1.msra.mxu0 0.0
    %1382 = vmatprep.subr.mxu0 0.0
    %1383 = vmatpush1.msra.mxu0 0.0
    %1384 = vmatprep.subr.mxu0 0.0
    %1385 = vmatpush1.msra.mxu0 0.0
    %1386 = vmatprep.subr.mxu0 0.0
    %1387 = vmatpush1.msra.mxu0 0.0
    %1388 = vmatprep.subr.mxu0 0.0
    %1389 = vmatpush1.msra.mxu0 0.0
    %1390 = vmatprep.subr.mxu0 0.0
    %1391 = vmatpush1.msra.mxu0 0.0
    %1392 = vmatprep.subr.mxu0 0.0
    %1393 = vmatpush1.msra.mxu0 0.0
    %1394 = vmatprep.mubr.f32.mxu0 0.0
    %v1395 = vand.u32 %v1032, 4294901760
    %v1396 = vsub.f32 %v1032, %v1395
    %1397 = vmatmul.mubr.f32.gmra.mrb[0].mxu0 %v1396
    %v1398 = vpop.f32.mrb[0].mxu0
    %v1399 = vadd.f32 %v1295, %v1398
    %v1400 = vpop.f32.mrb[0].mxu0
    %1401 = vdwg.mxu0
    %1402 = vmatprep.subr.mxu0 0.0
    %v1403 = vand.u32 %v1033, 4294901760
    %1404 = vmatpush1.msra.mxu0 %v1403
    %1405 = vmatprep.subr.mxu0 0.0
    %v1406 = vand.u32 %v1034, 4294901760
    %1407 = vmatpush1.msra.mxu0 %v1406
    %1408 = vmatprep.subr.mxu0 0.0
    %v1409 = vand.u32 %v1035, 4294901760
    %1410 = vmatpush1.msra.mxu0 %v1409
    %1411 = vmatprep.subr.mxu0 0.0
    %v1412 = vand.u32 %v1036, 4294901760
    %1413 = vmatpush1.msra.mxu0 %v1412
    %1414 = vmatprep.subr.mxu0 0.0
    %v1415 = vand.u32 %v1037, 4294901760
    %1416 = vmatpush1.msra.mxu0 %v1415
    %1417 = vmatprep.subr.mxu0 0.0
    %v1418 = vand.u32 %v1038, 4294901760
    %1419 = vmatpush1.msra.mxu0 %v1418
    %1420 = vmatprep.subr.mxu0 0.0
    %v1421 = vand.u32 %v1039, 4294901760
    %1422 = vmatpush1.msra.mxu0 %v1421
    %1423 = vmatprep.subr.mxu0 0.0
    %v1424 = vand.u32 %v1040, 4294901760
    %1425 = vmatpush1.msra.mxu0 %v1424
    %1426 = vmatprep.subr.mxu0 0.0
    %v1427 = vand.u32 %v1041, 4294901760
    %1428 = vmatpush1.msra.mxu0 %v1427
    %1429 = vmatprep.subr.mxu0 0.0
    %v1430 = vand.u32 %v1042, 4294901760
    %1431 = vmatpush1.msra.mxu0 %v1430
    %1432 = vmatprep.subr.mxu0 0.0
    %v1433 = vand.u32 %v1043, 4294901760
    %1434 = vmatpush1.msra.mxu0 %v1433
    %1435 = vmatprep.subr.mxu0 0.0
    %v1436 = vand.u32 %v1044, 4294901760
    %1437 = vmatpush1.msra.mxu0 %v1436
    %1438 = vmatprep.subr.mxu0 0.0
    %v1439 = vand.u32 %v1045, 4294901760
    %1440 = vmatpush1.msra.mxu0 %v1439
    %1441 = vmatprep.subr.mxu0 0.0
    %v1442 = vand.u32 %v1046, 4294901760
    %1443 = vmatpush1.msra.mxu0 %v1442
    %1444 = vmatprep.subr.mxu0 0.0
    %v1445 = vand.u32 %v1047, 4294901760
    %1446 = vmatpush1.msra.mxu0 %v1445
    %1447 = vmatprep.subr.mxu0 0.0
    %v1448 = vand.u32 %v1048, 4294901760
    %1449 = vmatpush1.msra.mxu0 %v1448
    %1450 = vmatprep.subr.mxu0 0.0
    %1451 = vmatpush1.msra.mxu0 0.0
    %1452 = vmatprep.subr.mxu0 0.0
    %1453 = vmatpush1.msra.mxu0 0.0
    %1454 = vmatprep.subr.mxu0 0.0
    %1455 = vmatpush1.msra.mxu0 0.0
    %1456 = vmatprep.subr.mxu0 0.0
    %1457 = vmatpush1.msra.mxu0 0.0
    %1458 = vmatprep.subr.mxu0 0.0
    %1459 = vmatpush1.msra.mxu0 0.0
    %1460 = vmatprep.subr.mxu0 0.0
    %1461 = vmatpush1.msra.mxu0 0.0
    %1462 = vmatprep.subr.mxu0 0.0
    %1463 = vmatpush1.msra.mxu0 0.0
    %1464 = vmatprep.subr.mxu0 0.0
    %1465 = vmatpush1.msra.mxu0 0.0
    %1466 = vmatprep.subr.mxu0 0.0
    %1467 = vmatpush1.msra.mxu0 0.0
    %1468 = vmatprep.subr.mxu0 0.0
    %1469 = vmatpush1.msra.mxu0 0.0
    %1470 = vmatprep.subr.mxu0 0.0
    %1471 = vmatpush1.msra.mxu0 0.0
    %1472 = vmatprep.subr.mxu0 0.0
    %1473 = vmatpush1.msra.mxu0 0.0
    %1474 = vmatprep.subr.mxu0 0.0
    %1475 = vmatpush1.msra.mxu0 0.0
    %1476 = vmatprep.subr.mxu0 0.0
    %1477 = vmatpush1.msra.mxu0 0.0
    %1478 = vmatprep.subr.mxu0 0.0
    %1479 = vmatpush1.msra.mxu0 0.0
    %1480 = vmatprep.subr.mxu0 0.0
    %1481 = vmatpush1.msra.mxu0 0.0
    %1482 = vmatprep.mubr.f32.mxu0 0.0
    %v1483 = vand.u32 %v1032, 4294901760
    %v1484 = vsub.f32 %v1032, %v1483
    %v1485 = vand.u32 %v1484, 4294901760
    %1486 = vmatmul.mubr.f32.gmra.mrb[0].mxu0 %v1485
    %v1487 = vpop.f32.mrb[0].mxu0
    %v1488 = vadd.f32 %v1399, %v1487
    %v1489 = vpop.f32.mrb[0].mxu0
    %1490 = vdwg.mxu0
    %1491 = vmatprep.subr.mxu0 0.0
    %v1492 = vand.u32 %v1033, 4294901760
    %v1493 = vsub.f32 %v1033, %v1492
    %v1494 = vand.u32 %v1493, 4294901760
    %1495 = vmatpush1.msra.mxu0 %v1494
    %1496 = vmatprep.subr.mxu0 0.0
    %v1497 = vand.u32 %v1034, 4294901760
    %v1498 = vsub.f32 %v1034, %v1497
    %v1499 = vand.u32 %v1498, 4294901760
    %1500 = vmatpush1.msra.mxu0 %v1499
    %1501 = vmatprep.subr.mxu0 0.0
    %v1502 = vand.u32 %v1035, 4294901760
    %v1503 = vsub.f32 %v1035, %v1502
    %v1504 = vand.u32 %v1503, 4294901760
    %1505 = vmatpush1.msra.mxu0 %v1504
    %1506 = vmatprep.subr.mxu0 0.0
    %v1507 = vand.u32 %v1036, 4294901760
    %v1508 = vsub.f32 %v1036, %v1507
    %v1509 = vand.u32 %v1508, 4294901760
    %1510 = vmatpush1.msra.mxu0 %v1509
    %1511 = vmatprep.subr.mxu0 0.0
    %v1512 = vand.u32 %v1037, 4294901760
    %v1513 = vsub.f32 %v1037, %v1512
    %v1514 = vand.u32 %v1513, 4294901760
    %1515 = vmatpush1.msra.mxu0 %v1514
    %1516 = vmatprep.subr.mxu0 0.0
    %v1517 = vand.u32 %v1038, 4294901760
    %v1518 = vsub.f32 %v1038, %v1517
    %v1519 = vand.u32 %v1518, 4294901760
    %1520 = vmatpush1.msra.mxu0 %v1519
    %1521 = vmatprep.subr.mxu0 0.0
    %v1522 = vand.u32 %v1039, 4294901760
    %v1523 = vsub.f32 %v1039, %v1522
    %v1524 = vand.u32 %v1523, 4294901760
    %1525 = vmatpush1.msra.mxu0 %v1524
    %1526 = vmatprep.subr.mxu0 0.0
    %v1527 = vand.u32 %v1040, 4294901760
    %v1528 = vsub.f32 %v1040, %v1527
    %v1529 = vand.u32 %v1528, 4294901760
    %1530 = vmatpush1.msra.mxu0 %v1529
    %1531 = vmatprep.subr.mxu0 0.0
    %v1532 = vand.u32 %v1041, 4294901760
    %v1533 = vsub.f32 %v1041, %v1532
    %v1534 = vand.u32 %v1533, 4294901760
    %1535 = vmatpush1.msra.mxu0 %v1534
    %1536 = vmatprep.subr.mxu0 0.0
    %v1537 = vand.u32 %v1042, 4294901760
    %v1538 = vsub.f32 %v1042, %v1537
    %v1539 = vand.u32 %v1538, 4294901760
    %1540 = vmatpush1.msra.mxu0 %v1539
    %1541 = vmatprep.subr.mxu0 0.0
    %v1542 = vand.u32 %v1043, 4294901760
    %v1543 = vsub.f32 %v1043, %v1542
    %v1544 = vand.u32 %v1543, 4294901760
    %1545 = vmatpush1.msra.mxu0 %v1544
    %1546 = vmatprep.subr.mxu0 0.0
    %v1547 = vand.u32 %v1044, 4294901760
    %v1548 = vsub.f32 %v1044, %v1547
    %v1549 = vand.u32 %v1548, 4294901760
    %1550 = vmatpush1.msra.mxu0 %v1549
    %1551 = vmatprep.subr.mxu0 0.0
    %v1552 = vand.u32 %v1045, 4294901760
    %v1553 = vsub.f32 %v1045, %v1552
    %v1554 = vand.u32 %v1553, 4294901760
    %1555 = vmatpush1.msra.mxu0 %v1554
    %1556 = vmatprep.subr.mxu0 0.0
    %v1557 = vand.u32 %v1046, 4294901760
    %v1558 = vsub.f32 %v1046, %v1557
    %v1559 = vand.u32 %v1558, 4294901760
    %1560 = vmatpush1.msra.mxu0 %v1559
    %1561 = vmatprep.subr.mxu0 0.0
    %v1562 = vand.u32 %v1047, 4294901760
    %v1563 = vsub.f32 %v1047, %v1562
    %v1564 = vand.u32 %v1563, 4294901760
    %1565 = vmatpush1.msra.mxu0 %v1564
    %1566 = vmatprep.subr.mxu0 0.0
    %v1567 = vand.u32 %v1048, 4294901760
    %v1568 = vsub.f32 %v1048, %v1567
    %v1569 = vand.u32 %v1568, 4294901760
    %1570 = vmatpush1.msra.mxu0 %v1569
    %1571 = vmatprep.subr.mxu0 0.0
    %1572 = vmatpush1.msra.mxu0 0.0
    %1573 = vmatprep.subr.mxu0 0.0
    %1574 = vmatpush1.msra.mxu0 0.0
    %1575 = vmatprep.subr.mxu0 0.0
    %1576 = vmatpush1.msra.mxu0 0.0
    %1577 = vmatprep.subr.mxu0 0.0
    %1578 = vmatpush1.msra.mxu0 0.0
    %1579 = vmatprep.subr.mxu0 0.0
    %1580 = vmatpush1.msra.mxu0 0.0
    %1581 = vmatprep.subr.mxu0 0.0
    %1582 = vmatpush1.msra.mxu0 0.0
    %1583 = vmatprep.subr.mxu0 0.0
    %1584 = vmatpush1.msra.mxu0 0.0
    %1585 = vmatprep.subr.mxu0 0.0
    %1586 = vmatpush1.msra.mxu0 0.0
    %1587 = vmatprep.subr.mxu0 0.0
    %1588 = vmatpush1.msra.mxu0 0.0
    %1589 = vmatprep.subr.mxu0 0.0
    %1590 = vmatpush1.msra.mxu0 0.0
    %1591 = vmatprep.subr.mxu0 0.0
    %1592 = vmatpush1.msra.mxu0 0.0
    %1593 = vmatprep.subr.mxu0 0.0
    %1594 = vmatpush1.msra.mxu0 0.0
    %1595 = vmatprep.subr.mxu0 0.0
    %1596 = vmatpush1.msra.mxu0 0.0
    %1597 = vmatprep.subr.mxu0 0.0
    %1598 = vmatpush1.msra.mxu0 0.0
    %1599 = vmatprep.subr.mxu0 0.0
    %1600 = vmatpush1.msra.mxu0 0.0
    %1601 = vmatprep.subr.mxu0 0.0
    %1602 = vmatpush1.msra.mxu0 0.0
    %1603 = vmatprep.mubr.f32.mxu0 0.0
    %v1604 = vand.u32 %v1032, 4294901760
    %1605 = vmatmul.mubr.f32.gmra.mrb[0].mxu0 %v1604
    %v1606 = vpop.f32.mrb[0].mxu0
    %v1607 = vadd.f32 %v1488, %v1606
    %v1608 = vpop.f32.mrb[0].mxu0
    %1609 = vdwg.mxu0
    %1610 = vmatprep.subr.mxu0 0.0
    %v1611 = vand.u32 %v1033, 4294901760
    %1612 = vmatpush1.msra.mxu0 %v1611
    %1613 = vmatprep.subr.mxu0 0.0
    %v1614 = vand.u32 %v1034, 4294901760
    %1615 = vmatpush1.msra.mxu0 %v1614
    %1616 = vmatprep.subr.mxu0 0.0
    %v1617 = vand.u32 %v1035, 4294901760
    %1618 = vmatpush1.msra.mxu0 %v1617
    %1619 = vmatprep.subr.mxu0 0.0
    %v1620 = vand.u32 %v1036, 4294901760
    %1621 = vmatpush1.msra.mxu0 %v1620
    %1622 = vmatprep.subr.mxu0 0.0
    %v1623 = vand.u32 %v1037, 4294901760
    %1624 = vmatpush1.msra.mxu0 %v1623
    %1625 = vmatprep.subr.mxu0 0.0
    %v1626 = vand.u32 %v1038, 4294901760
    %1627 = vmatpush1.msra.mxu0 %v1626
    %1628 = vmatprep.subr.mxu0 0.0
    %v1629 = vand.u32 %v1039, 4294901760
    %1630 = vmatpush1.msra.mxu0 %v1629
    %1631 = vmatprep.subr.mxu0 0.0
    %v1632 = vand.u32 %v1040, 4294901760
    %1633 = vmatpush1.msra.mxu0 %v1632
    %1634 = vmatprep.subr.mxu0 0.0
    %v1635 = vand.u32 %v1041, 4294901760
    %1636 = vmatpush1.msra.mxu0 %v1635
    %1637 = vmatprep.subr.mxu0 0.0
    %v1638 = vand.u32 %v1042, 4294901760
    %1639 = vmatpush1.msra.mxu0 %v1638
    %1640 = vmatprep.subr.mxu0 0.0
    %v1641 = vand.u32 %v1043, 4294901760
    %1642 = vmatpush1.msra.mxu0 %v1641
    %1643 = vmatprep.subr.mxu0 0.0
    %v1644 = vand.u32 %v1044, 4294901760
    %1645 = vmatpush1.msra.mxu0 %v1644
    %1646 = vmatprep.subr.mxu0 0.0
    %v1647 = vand.u32 %v1045, 4294901760
    %1648 = vmatpush1.msra.mxu0 %v1647
    %1649 = vmatprep.subr.mxu0 0.0
    %v1650 = vand.u32 %v1046, 4294901760
    %1651 = vmatpush1.msra.mxu0 %v1650
    %1652 = vmatprep.subr.mxu0 0.0
    %v1653 = vand.u32 %v1047, 4294901760
    %1654 = vmatpush1.msra.mxu0 %v1653
    %1655 = vmatprep.subr.mxu0 0.0
    %v1656 = vand.u32 %v1048, 4294901760
    %1657 = vmatpush1.msra.mxu0 %v1656
    %1658 = vmatprep.subr.mxu0 0.0
    %1659 = vmatpush1.msra.mxu0 0.0
    %1660 = vmatprep.subr.mxu0 0.0
    %1661 = vmatpush1.msra.mxu0 0.0
    %1662 = vmatprep.subr.mxu0 0.0
    %1663 = vmatpush1.msra.mxu0 0.0
    %1664 = vmatprep.subr.mxu0 0.0
    %1665 = vmatpush1.msra.mxu0 0.0
    %1666 = vmatprep.subr.mxu0 0.0
    %1667 = vmatpush1.msra.mxu0 0.0
    %1668 = vmatprep.subr.mxu0 0.0
    %1669 = vmatpush1.msra.mxu0 0.0
    %1670 = vmatprep.subr.mxu0 0.0
    %1671 = vmatpush1.msra.mxu0 0.0
    %1672 = vmatprep.subr.mxu0 0.0
    %1673 = vmatpush1.msra.mxu0 0.0
    %1674 = vmatprep.subr.mxu0 0.0
    %1675 = vmatpush1.msra.mxu0 0.0
    %1676 = vmatprep.subr.mxu0 0.0
    %1677 = vmatpush1.msra.mxu0 0.0
    %1678 = vmatprep.subr.mxu0 0.0
    %1679 = vmatpush1.msra.mxu0 0.0
    %1680 = vmatprep.subr.mxu0 0.0
    %1681 = vmatpush1.msra.mxu0 0.0
    %1682 = vmatprep.subr.mxu0 0.0
    %1683 = vmatpush1.msra.mxu0 0.0
    %1684 = vmatprep.subr.mxu0 0.0
    %1685 = vmatpush1.msra.mxu0 0.0
    %1686 = vmatprep.subr.mxu0 0.0
    %1687 = vmatpush1.msra.mxu0 0.0
    %1688 = vmatprep.subr.mxu0 0.0
    %1689 = vmatpush1.msra.mxu0 0.0
    %1690 = vmatprep.mubr.f32.mxu0 0.0
    %v1691 = vand.u32 %v1032, 4294901760
    %1692 = vmatmul.mubr.f32.gmra.mrb[0].mxu0 %v1691
    %v1693 = vpop.f32.mrb[0].mxu0
    %v1694 = vadd.f32 %v1607, %v1693
    %v1695 = vpop.f32.mrb[0].mxu0
    %1696 = vdwg.mxu0
    %1697 = vst [vmem:[#allocation10] sm:$0xff] %v1694
    // Predicated region
    $region46: #{tpu_custom_call.1} parent=1 // pred_check
      _
    $region47: #{tpu_custom_call.1} parent=1 // pred_check_branch
      %1699 = sbr.rel (0) target = $region49
    $region48: #{tpu_custom_call.1} parent=1 // pred_region
      %s1701 = ssub.s32 128, 128
      %1702 = vsyncadd [#allocation4], %s1701
      %s1704 = sshll.u32 [#allocation10], 4
      %s1705 = int_to_ptr.vmem [resolvable:$true] %s1704
      %1707 = dma.vmem_to_hbm [thread:$0]  %s1705, 128, %s7, [#allocation4]
    $region49: #{tpu_custom_call.1} parent=1 // pred_fallthru
      _
    // Predicated region
    $region50: #{tpu_custom_call.1} parent=1 // pred_check
      _
    $region51: #{tpu_custom_call.1} parent=1 // pred_check_branch
      %1709 = sbr.rel (0) target = $region53
    $region52: #{tpu_custom_call.1} parent=1 // pred_region
      %1710 = dma.done [#allocation4], 128
    $region53: #{tpu_custom_call.1} parent=1 // pred_fallthru
      _
    %1711 = vsyncpa [#allocation3], 1
    %1712 = vsyncpa [#allocation6], 1
    %1713 = vsyncpa [#allocation9], 1
    %1714 = vsyncpa [#allocation4], 1

</llo_original>
